<compile_context>
chip_gen: v7x
topology: tpu7x:2x2x1
jax: 0.10.0
libtpu: 0.0.40
codegen_flags: <defaults>
</compile_context>

<pallas_src>
import functools

import numpy as np
import jax
import jax.numpy as jnp
from jax.experimental import pallas as pl
from jax.experimental.pallas import tpu as pltpu


# ----------------------------- activations ---------------------------------
def _hardswish(x):
    return x * jnp.clip(x + 3.0, 0.0, 6.0) * (1.0 / 6.0)


def _hardsigmoid(x):
    return jnp.clip(x + 3.0, 0.0, 6.0) * (1.0 / 6.0)


# ------------------------------ fused kernel --------------------------------
def _inverted_residual_kernel(
    x_ref, w_exp_ref, b_exp_ref, w_dw_ref, b_dw_ref, mask_ref,
    w_se1_ref, b_se1_ref, w_se2_ref, b_se2_ref, w_proj_ref, b_proj_ref,
    o_ref, scr_ref, *, H, W, K, pad_off, act, use_se, use_res, expand):
    """One sample per grid step.  Layout: channels on sublanes, H*W on lanes.

    x_ref   : (Cin,  H*W)       w_exp : (Cexp, Cin)   b_exp : (Cexp, 1)
    w_dw    : (Cexp, K*K)       b_dw  : (Cexp, 1)     mask  : (K, H*W)
    w_se1   : (Cexp, Csq)       b_se1 : (1, Csq)
    w_se2   : (Cexp, Csq)       b_se2 : (Cexp, 1)
    w_proj  : (Cout, Cexp)      b_proj: (Cout, 1)
    o_ref   : (Cout, H*W)       scr   : (Cexp, pad_off + H*W + pad_off) VMEM
    """
    HW = H * W
    pad = (K - 1) // 2

    def activation(v):
        if act == "hardswish":
            return v * jnp.clip(v + 3.0, 0.0, 6.0) * (1.0 / 6.0)
        return jnp.maximum(v, 0.0)

    x = x_ref[...]                                            # (Cin, HW)

    # ---- 1) expand 1x1 conv (+ folded BN) + activation ---------------------
    if expand:
        h = jnp.dot(w_exp_ref[...], x, preferred_element_type=jnp.float32)
        h = activation(h + b_exp_ref[...])                    # (Cexp, HW)
    else:
        h = x
    cexp = h.shape[0]

    # ---- 2) depthwise KxK conv (stride=1, dilation=1, zero padding) --------
    # Park h in a zero-haloed scratch row so every tap is a static window load
    # at lane offset pad_off + dh*W + dw.  The zero halo supplies the vertical
    # padding; precomputed mask rows kill the horizontal row-wrap lanes.
    # Only the halo bands are zeroed (128-aligned, 128-wide -> unmasked vst);
    # the interior is fully overwritten right after.  Re-done every step so it
    # is megacore-safe (scratch is per-core and uninitialized).
    right = scr_ref.shape[1] - pad_off - HW
    scr_ref[:, :pad_off] = jnp.zeros((cexp, pad_off), jnp.float32)
    scr_ref[:, pad_off + HW:] = jnp.zeros((cexp, right), jnp.float32)
    scr_ref[:, pad_off:pad_off + HW] = h                      # 128-aligned store

    wd = w_dw_ref[...]                                        # (Cexp, K*K)
    acc = jnp.zeros((cexp, HW), jnp.float32)
    for kh in range(K):
        for kw in range(K):
            dh, dw = kh - pad, kw - pad
            start = pad_off + dh * W + dw
            tap = scr_ref[:, start:start + HW]                # (Cexp, HW)
            if dw != 0:                                       # horizontal edges
                tap = tap * mask_ref[kw:kw + 1, :]
            acc = acc + tap * wd[:, kh * K + kw:kh * K + kw + 1]
    h = activation(acc + b_dw_ref[...])

    # ---- 3) squeeze-excitation (fused; no extra HBM round-trip) ------------
    if use_se:
        pooled = jnp.mean(h, axis=1, keepdims=True)                       # (Cexp, 1)
        z1 = jnp.sum(w_se1_ref[...] * pooled, axis=0, keepdims=True)      # (1, Csq)
        z1 = jnp.maximum(z1 + b_se1_ref[...], 0.0)                        # ReLU
        s = jnp.sum(w_se2_ref[...] * z1, axis=1, keepdims=True)           # (Cexp, 1)
        s = jnp.clip(s + b_se2_ref[...] + 3.0, 0.0, 6.0) * (1.0 / 6.0)    # Hardsigmoid
        h = h * s

    # ---- 4) project 1x1 conv (+ folded BN, no act) + residual --------------
    y = jnp.dot(w_proj_ref[...], h, preferred_element_type=jnp.float32)
    y = y + b_proj_ref[...]
    if use_res:
        y = y + x
    o_ref[...] = y.astype(o_ref.dtype)


# ------------------------------- wrapper -------------------------------------
def inverted_residual_forward(x_nchw, params, *, use_se, use_hs, kernel_size):
    N, Cin, H, W = x_nchw.shape
    HW = H * W
    K = kernel_size
    pad = (K - 1) // 2
    Cexp = params["w_dw"].shape[0]
    Cout = params["w_proj"].shape[0]
    act = "hardswish" if use_hs else "relu"
    expand = Cexp != Cin
    use_res = Cin == Cout                      # stride == 1 path

    # NCHW -> (N, C, H*W): metadata-only reshape (no transpose), lane-dense HW.
    x = x_nchw.reshape(N, Cin, HW).astype(jnp.float32)

    # Horizontal-edge masks for the depthwise taps (host precomputed, f32 0/1).
    col = np.arange(HW) % W
    dw_mask = np.stack(
        [((col + dw >= 0) & (col + dw < W)).astype(np.float32)
         for dw in range(-pad, pad + 1)], axis=0)             # (K, HW)
    dw_mask = jnp.asarray(dw_mask)

    # Lane offset of the interior inside the scratch row (128-aligned halo).
    pad_off = ((pad * W + pad + 127) // 128) * 128
    scr_len = pad_off + HW + pad_off

    kernel = functools.partial(
        _inverted_residual_kernel, H=H, W=W, K=K, pad_off=pad_off,
        act=act, use_se=use_se, use_res=use_res, expand=expand)

    def full2(a):  # whole (2-D) array as one block (DMA'd once: constant index)
        return pl.BlockSpec(a.shape, lambda n: (0, 0))

    # Advisory cost estimate for XLA's scheduler around the custom call.
    flops = 2 * N * HW * ((Cexp * Cin if expand else 0) + K * K * Cexp + Cout * Cexp)
    param_bytes = sum(int(np.prod(p.shape)) for p in params.values()) * 4
    bytes_accessed = int(x.size * 4 + N * Cout * HW * 4 + param_bytes)
    cost = pl.CostEstimate(flops=int(flops), transcendentals=0,
                           bytes_accessed=bytes_accessed)

    out = pl.pallas_call(
        kernel,
        out_shape=jax.ShapeDtypeStruct((N, Cout, HW), jnp.float32),
        grid=(N,),
        in_specs=[
            pl.BlockSpec((None, Cin, HW), lambda n: (n, 0, 0)),
            full2(params["w_exp"]), full2(params["b_exp"]),
            full2(params["w_dw"]), full2(params["b_dw"]),
            full2(dw_mask),
            full2(params["w_se1"]), full2(params["b_se1"]),
            full2(params["w_se2"]), full2(params["b_se2"]),
            full2(params["w_proj"]), full2(params["b_proj"]),
        ],
        out_specs=pl.BlockSpec((None, Cout, HW), lambda n: (n, 0, 0)),
        scratch_shapes=[pltpu.VMEM((Cexp, scr_len), jnp.float32)],
        compiler_params=pltpu.CompilerParams(
            dimension_semantics=("parallel",)),
        cost_estimate=cost,
    )(x, params["w_exp"], params["b_exp"], params["w_dw"], params["b_dw"],
      dw_mask,
      params["w_se1"], params["b_se1"], params["w_se2"], params["b_se2"],
      params["w_proj"], params["b_proj"])

    return out.reshape(N, Cout, H, W)


# ----------------------- deterministic synthetic params ----------------------
def make_divisible(v, divisor=8, min_value=None):
    if min_value is None:
        min_value = divisor
    new_v = max(min_value, int(v + divisor / 2) // divisor * divisor)
    if new_v < 0.9 * v:
        new_v += divisor
    return new_v


def make_params(key, cin, cexp, cout, k, csq):
    ks = jax.random.split(key, 10)

    def nrm(kk, shape, s=0.1):
        return jax.random.normal(kk, shape, jnp.float32) * s

    def bn(kk, c):
        k1, k2, k3, k4 = jax.random.split(kk, 4)
        gamma = 1.0 + 0.1 * jax.random.normal(k1, (c,), jnp.float32)
        beta = 0.1 * jax.random.normal(k2, (c,), jnp.float32)
        mean = 0.1 * jax.random.normal(k3, (c,), jnp.float32)
        var = jax.random.uniform(k4, (c,), jnp.float32, minval=0.5, maxval=1.5)
        return gamma, beta, mean, var

    def fold(w, bn_params, eps=1e-5):
        # eval-mode BN folded into channel-first conv weights / bias
        gamma, beta, mean, var = bn_params
        scale = gamma / jnp.sqrt(var + eps)
        return w * scale[:, None], (beta - mean * scale)[:, None]

    w_exp, b_exp = fold(nrm(ks[0], (cexp, cin)), bn(ks[3], cexp))
    w_dw, b_dw = fold(nrm(ks[1], (cexp, k * k)), bn(ks[4], cexp))
    w_proj, b_proj = fold(nrm(ks[2], (cout, cexp)), bn(ks[5], cout))
    return dict(
        w_exp=w_exp, b_exp=b_exp,
        w_dw=w_dw, b_dw=b_dw,
        w_proj=w_proj, b_proj=b_proj,
        w_se1=nrm(ks[6], (cexp, csq)), b_se1=nrm(ks[7], (1, csq)),
        w_se2=nrm(ks[8], (cexp, csq)), b_se2=nrm(ks[9], (cexp, 1)),
    )


# ------------------------------ pure-JAX reference ---------------------------
def reference_forward(x, params, *, kernel_size):
    N, Cin, H, W = x.shape
    K = kernel_size
    pad = (K - 1) // 2
    prec = jax.lax.Precision.HIGHEST

    h = jnp.einsum("ec,nchw->nehw", params["w_exp"], x, precision=prec)
    h = _hardswish(h + params["b_exp"][None, :, :, None])

    hpad = jnp.pad(h, ((0, 0), (0, 0), (pad, pad), (pad, pad)))
    acc = jnp.zeros_like(h)
    for kh in range(K):
        for kw in range(K):
            acc = acc + (hpad[:, :, kh:kh + H, kw:kw + W]
                         * params["w_dw"][None, :, kh * K + kw, None, None])
    h = _hardswish(acc + params["b_dw"][None, :, :, None])

    pooled = jnp.mean(h, axis=(2, 3))                                     # (N, Cexp)
    z1 = jnp.maximum(pooled @ params["w_se1"] + params["b_se1"], 0.0)     # (N, Csq)
    s = _hardsigmoid(z1 @ params["w_se2"].T + params["b_se2"][:, 0][None, :])
    h = h * s[:, :, None, None]

    o = jnp.einsum("oe,nehw->nohw", params["w_proj"], h, precision=prec)
    o = o + params["b_proj"][None, :, :, None]
    if params["w_proj"].shape[0] == Cin:                                  # residual
        o = o + x
    return o


# ------------------------------------ main ------------------------------------
if __name__ == "__main__":
    # InvertedResidual(in=8, expanded=16, out=8, k=3, stride=1, dilation=1,
    #                  use_se=True, use_hs=True)  -> residual connection active.
    N, Cin, H, W = 2, 8, 16, 16
    Cexp, Cout, K = 16, 8, 3
    Csq = make_divisible(Cexp // 4, 8)

    key = jax.random.PRNGKey(0)
    kx, kp = jax.random.split(key)
    x = jax.random.normal(kx, (N, Cin, H, W), jnp.float32)
    params = make_params(kp, Cin, Cexp, Cout, K, Csq)

    fwd = jax.jit(functools.partial(inverted_residual_forward,
                                    use_se=True, use_hs=True, kernel_size=K))
    out = jax.block_until_ready(fwd(x, params))
    assert out.shape == (N, Cout, H, W), out.shape

    ref = reference_forward(x, params, kernel_size=K)
    max_err = float(jnp.max(jnp.abs(out - ref)))
    assert jnp.allclose(out, ref, atol=3e-2, rtol=3e-2), max_err

    print("KERNEL_OK")
</pallas_src>

<mosaic_0001>
module attributes {stable_mosaic.version = 11 : i64} {
  func.func @_inverted_residual_kernel(%arg0: i32, %arg1: memref<1x8x256xf32, #tpu.memory_space<vmem>>, %arg2: memref<16x8xf32, #tpu.memory_space<vmem>>, %arg3: memref<16x1xf32, #tpu.memory_space<vmem>>, %arg4: memref<16x9xf32, #tpu.memory_space<vmem>>, %arg5: memref<16x1xf32, #tpu.memory_space<vmem>>, %arg6: memref<3x256xf32, #tpu.memory_space<vmem>>, %arg7: memref<16x8xf32, #tpu.memory_space<vmem>>, %arg8: memref<1x8xf32, #tpu.memory_space<vmem>>, %arg9: memref<16x8xf32, #tpu.memory_space<vmem>>, %arg10: memref<16x1xf32, #tpu.memory_space<vmem>>, %arg11: memref<8x16xf32, #tpu.memory_space<vmem>>, %arg12: memref<8x1xf32, #tpu.memory_space<vmem>>, %arg13: memref<1x8x256xf32, #tpu.memory_space<vmem>>, %arg14: memref<16x512xf32, #tpu.memory_space<vmem>>) attributes {dimension_semantics = [#tpu.dimension_semantics<parallel>], iteration_bounds = array<i64: 2>, scalar_prefetch = 0 : i64, scratch_operands = 1 : i64, tpu.core_type = #tpu.core_type<tc>, window_params = [{transform_indices = @transform_0, window_bounds = array<i64: 1, 8, 256>}, {pipeline_mode = #tpu.pipeline_mode<synchronous>, transform_indices = @transform_1, window_bounds = array<i64: 16, 8>}, {pipeline_mode = #tpu.pipeline_mode<synchronous>, transform_indices = @transform_2, window_bounds = array<i64: 16, 1>}, {pipeline_mode = #tpu.pipeline_mode<synchronous>, transform_indices = @transform_3, window_bounds = array<i64: 16, 9>}, {pipeline_mode = #tpu.pipeline_mode<synchronous>, transform_indices = @transform_4, window_bounds = array<i64: 16, 1>}, {pipeline_mode = #tpu.pipeline_mode<synchronous>, transform_indices = @transform_5, window_bounds = array<i64: 3, 256>}, {pipeline_mode = #tpu.pipeline_mode<synchronous>, transform_indices = @transform_6, window_bounds = array<i64: 16, 8>}, {pipeline_mode = #tpu.pipeline_mode<synchronous>, transform_indices = @transform_7, window_bounds = array<i64: 1, 8>}, {pipeline_mode = #tpu.pipeline_mode<synchronous>, transform_indices = @transform_8, window_bounds = array<i64: 16, 8>}, {pipeline_mode = #tpu.pipeline_mode<synchronous>, transform_indices = @transform_9, window_bounds = array<i64: 16, 1>}, {pipeline_mode = #tpu.pipeline_mode<synchronous>, transform_indices = @transform_10, window_bounds = array<i64: 8, 16>}, {pipeline_mode = #tpu.pipeline_mode<synchronous>, transform_indices = @transform_11, window_bounds = array<i64: 8, 1>}, {transform_indices = @transform_12, window_bounds = array<i64: 1, 8, 256>}]} {
    %c0 = arith.constant 0 : index
    %c0_0 = arith.constant 0 : index
    %c0_1 = arith.constant 0 : index
    %0 = vector.load %arg1[%c0, %c0_0, %c0_1] : memref<1x8x256xf32, #tpu.memory_space<vmem>>, vector<1x8x256xf32>
    %1 = vector.shape_cast %0 : vector<1x8x256xf32> to vector<8x256xf32>
    %c0_2 = arith.constant 0 : index
    %c0_3 = arith.constant 0 : index
    %2 = vector.load %arg2[%c0_2, %c0_3] : memref<16x8xf32, #tpu.memory_space<vmem>>, vector<16x8xf32>
    %cst = arith.constant dense<0.000000e+00> : vector<16x256xf32>
    %3 = tpu.matmul %2, %1, %cst {dimension_numbers = #tpu.dot_dimension_numbers<[1], [0], [0], [1], [0, 0, 1, 1], [], []>} : vector<16x8xf32>, vector<8x256xf32>, vector<16x256xf32> -> vector<16x256xf32>
    %c0_4 = arith.constant 0 : index
    %c0_5 = arith.constant 0 : index
    %4 = vector.load %arg3[%c0_4, %c0_5] : memref<16x1xf32, #tpu.memory_space<vmem>>, vector<16x1xf32>
    %5 = vector.broadcast %4 : vector<16x1xf32> to vector<16x256xf32>
    %6 = arith.addf %3, %5 : vector<16x256xf32>
    %cst_6 = arith.constant 3.000000e+00 : f32
    %7 = vector.broadcast %cst_6 : f32 to vector<16x256xf32>
    %8 = arith.addf %6, %7 : vector<16x256xf32>
    %cst_7 = arith.constant 0.000000e+00 : f32
    %cst_8 = arith.constant 6.000000e+00 : f32
    %9 = vector.broadcast %cst_7 : f32 to vector<16x256xf32>
    %10 = arith.maximumf %9, %8 : vector<16x256xf32>
    %11 = vector.broadcast %cst_8 : f32 to vector<16x256xf32>
    %12 = arith.minimumf %11, %10 : vector<16x256xf32>
    %13 = arith.mulf %6, %12 : vector<16x256xf32>
    %cst_9 = arith.constant 0.166666672 : f32
    %14 = vector.broadcast %cst_9 : f32 to vector<16x256xf32>
    %15 = arith.mulf %13, %14 : vector<16x256xf32>
    %cst_10 = arith.constant 0.000000e+00 : f32
    %16 = vector.broadcast %cst_10 : f32 to vector<16x128xf32>
    %c0_11 = arith.constant 0 : index
    %c0_12 = arith.constant 0 : index
    %17 = vector.load %arg14[%c0_11, %c0_12] : memref<16x512xf32, #tpu.memory_space<vmem>>, vector<16x128xf32>
    tpu.vector_store %arg14[%c0_11, %c0_12], %16 {strides = array<i32>} : memref<16x512xf32, #tpu.memory_space<vmem>>, vector<16x128xf32>,
    %cst_13 = arith.constant 0.000000e+00 : f32
    %18 = vector.broadcast %cst_13 : f32 to vector<16x128xf32>
    %c0_14 = arith.constant 0 : index
    %c384 = arith.constant 384 : index
    %19 = vector.load %arg14[%c0_14, %c384] : memref<16x512xf32, #tpu.memory_space<vmem>>, vector<16x128xf32>
    tpu.vector_store %arg14[%c0_14, %c384], %18 {strides = array<i32>} : memref<16x512xf32, #tpu.memory_space<vmem>>, vector<16x128xf32>,
    %c0_15 = arith.constant 0 : index
    %c128 = arith.constant 128 : index
    %20 = vector.load %arg14[%c0_15, %c128] : memref<16x512xf32, #tpu.memory_space<vmem>>, vector<16x256xf32>
    tpu.vector_store %arg14[%c0_15, %c128], %15 {strides = array<i32>} : memref<16x512xf32, #tpu.memory_space<vmem>>, vector<16x256xf32>,
    %c0_16 = arith.constant 0 : index
    %c0_17 = arith.constant 0 : index
    %21 = vector.load %arg4[%c0_16, %c0_17] : memref<16x9xf32, #tpu.memory_space<vmem>>, vector<16x9xf32>
    %cst_18 = arith.constant 0.000000e+00 : f32
    %22 = vector.broadcast %cst_18 : f32 to vector<16x256xf32>
    %c0_19 = arith.constant 0 : index
    %c111 = arith.constant 111 : index
    %23 = vector.load %arg14[%c0_19, %c111] : memref<16x512xf32, #tpu.memory_space<vmem>>, vector<16x256xf32>
    %c0_20 = arith.constant 0 : index
    %c0_21 = arith.constant 0 : index
    %24 = vector.load %arg6[%c0_20, %c0_21] : memref<3x256xf32, #tpu.memory_space<vmem>>, vector<1x256xf32>
    %25 = vector.broadcast %24 : vector<1x256xf32> to vector<16x256xf32>
    %26 = arith.mulf %23, %25 : vector<16x256xf32>
    %27 = vector.extract_strided_slice %21 {offsets = [0, 0], sizes = [16, 1], strides = [1, 1]} : vector<16x9xf32> to vector<16x1xf32>
    %28 = vector.broadcast %27 : vector<16x1xf32> to vector<16x256xf32>
    %29 = arith.mulf %26, %28 : vector<16x256xf32>
    %30 = arith.addf %22, %29 : vector<16x256xf32>
    %c0_22 = arith.constant 0 : index
    %c112 = arith.constant 112 : index
    %31 = vector.load %arg14[%c0_22, %c112] : memref<16x512xf32, #tpu.memory_space<vmem>>, vector<16x256xf32>
    %32 = vector.extract_strided_slice %21 {offsets = [0, 1], sizes = [16, 1], strides = [1, 1]} : vector<16x9xf32> to vector<16x1xf32>
    %33 = vector.broadcast %32 : vector<16x1xf32> to vector<16x256xf32>
    %34 = arith.mulf %31, %33 : vector<16x256xf32>
    %35 = arith.addf %30, %34 : vector<16x256xf32>
    %c0_23 = arith.constant 0 : index
    %c113 = arith.constant 113 : index
    %36 = vector.load %arg14[%c0_23, %c113] : memref<16x512xf32, #tpu.memory_space<vmem>>, vector<16x256xf32>
    %c2 = arith.constant 2 : index
    %c0_24 = arith.constant 0 : index
    %37 = vector.load %arg6[%c2, %c0_24] : memref<3x256xf32, #tpu.memory_space<vmem>>, vector<1x256xf32>
    %38 = vector.broadcast %37 : vector<1x256xf32> to vector<16x256xf32>
    %39 = arith.mulf %36, %38 : vector<16x256xf32>
    %40 = vector.extract_strided_slice %21 {offsets = [0, 2], sizes = [16, 1], strides = [1, 1]} : vector<16x9xf32> to vector<16x1xf32>
    %41 = vector.broadcast %40 : vector<16x1xf32> to vector<16x256xf32>
    %42 = arith.mulf %39, %41 : vector<16x256xf32>
    %43 = arith.addf %35, %42 : vector<16x256xf32>
    %c0_25 = arith.constant 0 : index
    %c127 = arith.constant 127 : index
    %44 = vector.load %arg14[%c0_25, %c127] : memref<16x512xf32, #tpu.memory_space<vmem>>, vector<16x256xf32>
    %c0_26 = arith.constant 0 : index
    %c0_27 = arith.constant 0 : index
    %45 = vector.load %arg6[%c0_26, %c0_27] : memref<3x256xf32, #tpu.memory_space<vmem>>, vector<1x256xf32>
    %46 = vector.broadcast %45 : vector<1x256xf32> to vector<16x256xf32>
    %47 = arith.mulf %44, %46 : vector<16x256xf32>
    %48 = vector.extract_strided_slice %21 {offsets = [0, 3], sizes = [16, 1], strides = [1, 1]} : vector<16x9xf32> to vector<16x1xf32>
    %49 = vector.broadcast %48 : vector<16x1xf32> to vector<16x256xf32>
    %50 = arith.mulf %47, %49 : vector<16x256xf32>
    %51 = arith.addf %43, %50 : vector<16x256xf32>
    %c0_28 = arith.constant 0 : index
    %c128_29 = arith.constant 128 : index
    %52 = vector.load %arg14[%c0_28, %c128_29] : memref<16x512xf32, #tpu.memory_space<vmem>>, vector<16x256xf32>
    %53 = vector.extract_strided_slice %21 {offsets = [0, 4], sizes = [16, 1], strides = [1, 1]} : vector<16x9xf32> to vector<16x1xf32>
    %54 = vector.broadcast %53 : vector<16x1xf32> to vector<16x256xf32>
    %55 = arith.mulf %52, %54 : vector<16x256xf32>
    %56 = arith.addf %51, %55 : vector<16x256xf32>
    %c0_30 = arith.constant 0 : index
    %c129 = arith.constant 129 : index
    %57 = vector.load %arg14[%c0_30, %c129] : memref<16x512xf32, #tpu.memory_space<vmem>>, vector<16x256xf32>
    %c2_31 = arith.constant 2 : index
    %c0_32 = arith.constant 0 : index
    %58 = vector.load %arg6[%c2_31, %c0_32] : memref<3x256xf32, #tpu.memory_space<vmem>>, vector<1x256xf32>
    %59 = vector.broadcast %58 : vector<1x256xf32> to vector<16x256xf32>
    %60 = arith.mulf %57, %59 : vector<16x256xf32>
    %61 = vector.extract_strided_slice %21 {offsets = [0, 5], sizes = [16, 1], strides = [1, 1]} : vector<16x9xf32> to vector<16x1xf32>
    %62 = vector.broadcast %61 : vector<16x1xf32> to vector<16x256xf32>
    %63 = arith.mulf %60, %62 : vector<16x256xf32>
    %64 = arith.addf %56, %63 : vector<16x256xf32>
    %c0_33 = arith.constant 0 : index
    %c143 = arith.constant 143 : index
    %65 = vector.load %arg14[%c0_33, %c143] : memref<16x512xf32, #tpu.memory_space<vmem>>, vector<16x256xf32>
    %c0_34 = arith.constant 0 : index
    %c0_35 = arith.constant 0 : index
    %66 = vector.load %arg6[%c0_34, %c0_35] : memref<3x256xf32, #tpu.memory_space<vmem>>, vector<1x256xf32>
    %67 = vector.broadcast %66 : vector<1x256xf32> to vector<16x256xf32>
    %68 = arith.mulf %65, %67 : vector<16x256xf32>
    %69 = vector.extract_strided_slice %21 {offsets = [0, 6], sizes = [16, 1], strides = [1, 1]} : vector<16x9xf32> to vector<16x1xf32>
    %70 = vector.broadcast %69 : vector<16x1xf32> to vector<16x256xf32>
    %71 = arith.mulf %68, %70 : vector<16x256xf32>
    %72 = arith.addf %64, %71 : vector<16x256xf32>
    %c0_36 = arith.constant 0 : index
    %c144 = arith.constant 144 : index
    %73 = vector.load %arg14[%c0_36, %c144] : memref<16x512xf32, #tpu.memory_space<vmem>>, vector<16x256xf32>
    %74 = vector.extract_strided_slice %21 {offsets = [0, 7], sizes = [16, 1], strides = [1, 1]} : vector<16x9xf32> to vector<16x1xf32>
    %75 = vector.broadcast %74 : vector<16x1xf32> to vector<16x256xf32>
    %76 = arith.mulf %73, %75 : vector<16x256xf32>
    %77 = arith.addf %72, %76 : vector<16x256xf32>
    %c0_37 = arith.constant 0 : index
    %c145 = arith.constant 145 : index
    %78 = vector.load %arg14[%c0_37, %c145] : memref<16x512xf32, #tpu.memory_space<vmem>>, vector<16x256xf32>
    %c2_38 = arith.constant 2 : index
    %c0_39 = arith.constant 0 : index
    %79 = vector.load %arg6[%c2_38, %c0_39] : memref<3x256xf32, #tpu.memory_space<vmem>>, vector<1x256xf32>
    %80 = vector.broadcast %79 : vector<1x256xf32> to vector<16x256xf32>
    %81 = arith.mulf %78, %80 : vector<16x256xf32>
    %82 = vector.extract_strided_slice %21 {offsets = [0, 8], sizes = [16, 1], strides = [1, 1]} : vector<16x9xf32> to vector<16x1xf32>
    %83 = vector.broadcast %82 : vector<16x1xf32> to vector<16x256xf32>
    %84 = arith.mulf %81, %83 : vector<16x256xf32>
    %85 = arith.addf %77, %84 : vector<16x256xf32>
    %c0_40 = arith.constant 0 : index
    %c0_41 = arith.constant 0 : index
    %86 = vector.load %arg5[%c0_40, %c0_41] : memref<16x1xf32, #tpu.memory_space<vmem>>, vector<16x1xf32>
    %87 = vector.broadcast %86 : vector<16x1xf32> to vector<16x256xf32>
    %88 = arith.addf %85, %87 : vector<16x256xf32>
    %cst_42 = arith.constant 3.000000e+00 : f32
    %89 = vector.broadcast %cst_42 : f32 to vector<16x256xf32>
    %90 = arith.addf %88, %89 : vector<16x256xf32>
    %cst_43 = arith.constant 0.000000e+00 : f32
    %cst_44 = arith.constant 6.000000e+00 : f32
    %91 = vector.broadcast %cst_43 : f32 to vector<16x256xf32>
    %92 = arith.maximumf %91, %90 : vector<16x256xf32>
    %93 = vector.broadcast %cst_44 : f32 to vector<16x256xf32>
    %94 = arith.minimumf %93, %92 : vector<16x256xf32>
    %95 = arith.mulf %88, %94 : vector<16x256xf32>
    %cst_45 = arith.constant 0.166666672 : f32
    %96 = vector.broadcast %cst_45 : f32 to vector<16x256xf32>
    %97 = arith.mulf %95, %96 : vector<16x256xf32>
    %cst_46 = arith.constant dense<0.000000e+00> : vector<16xf32>
    %98 = vector.multi_reduction <add>, %97, %cst_46 [1] : vector<16x256xf32> to vector<16xf32>
    %99 = vector.shape_cast %98 : vector<16xf32> to vector<16x1xf32>
    %cst_47 = arith.constant 2.560000e+02 : f32
    %100 = vector.broadcast %cst_47 : f32 to vector<16x1xf32>
    %101 = arith.divf %99, %100 : vector<16x1xf32>
    %c0_48 = arith.constant 0 : index
    %c0_49 = arith.constant 0 : index
    %102 = vector.load %arg7[%c0_48, %c0_49] : memref<16x8xf32, #tpu.memory_space<vmem>>, vector<16x8xf32>
    %103 = vector.broadcast %101 : vector<16x1xf32> to vector<16x8xf32>
    %104 = arith.mulf %102, %103 : vector<16x8xf32>
    %cst_50 = arith.constant dense<0.000000e+00> : vector<8xf32>
    %105 = vector.multi_reduction <add>, %104, %cst_50 [0] : vector<16x8xf32> to vector<8xf32>
    %106 = vector.shape_cast %105 : vector<8xf32> to vector<1x8xf32>
    %c0_51 = arith.constant 0 : index
    %c0_52 = arith.constant 0 : index
    %107 = vector.load %arg8[%c0_51, %c0_52] : memref<1x8xf32, #tpu.memory_space<vmem>>, vector<1x8xf32>
    %108 = arith.addf %106, %107 : vector<1x8xf32>
    %cst_53 = arith.constant 0.000000e+00 : f32
    %109 = vector.broadcast %cst_53 : f32 to vector<1x8xf32>
    %110 = arith.maximumf %108, %109 : vector<1x8xf32>
    %c0_54 = arith.constant 0 : index
    %c0_55 = arith.constant 0 : index
    %111 = vector.load %arg9[%c0_54, %c0_55] : memref<16x8xf32, #tpu.memory_space<vmem>>, vector<16x8xf32>
    %112 = vector.broadcast %110 : vector<1x8xf32> to vector<16x8xf32>
    %113 = arith.mulf %111, %112 : vector<16x8xf32>
    %cst_56 = arith.constant dense<0.000000e+00> : vector<16xf32>
    %114 = vector.multi_reduction <add>, %113, %cst_56 [1] : vector<16x8xf32> to vector<16xf32>
    %115 = vector.shape_cast %114 : vector<16xf32> to vector<16x1xf32>
    %c0_57 = arith.constant 0 : index
    %c0_58 = arith.constant 0 : index
    %116 = vector.load %arg10[%c0_57, %c0_58] : memref<16x1xf32, #tpu.memory_space<vmem>>, vector<16x1xf32>
    %117 = arith.addf %115, %116 : vector<16x1xf32>
    %cst_59 = arith.constant 3.000000e+00 : f32
    %118 = vector.broadcast %cst_59 : f32 to vector<16x1xf32>
    %119 = arith.addf %117, %118 : vector<16x1xf32>
    %cst_60 = arith.constant 0.000000e+00 : f32
    %cst_61 = arith.constant 6.000000e+00 : f32
    %120 = vector.broadcast %cst_60 : f32 to vector<16x1xf32>
    %121 = arith.maximumf %120, %119 : vector<16x1xf32>
    %122 = vector.broadcast %cst_61 : f32 to vector<16x1xf32>
    %123 = arith.minimumf %122, %121 : vector<16x1xf32>
    %cst_62 = arith.constant 0.166666672 : f32
    %124 = vector.broadcast %cst_62 : f32 to vector<16x1xf32>
    %125 = arith.mulf %123, %124 : vector<16x1xf32>
    %126 = vector.broadcast %125 : vector<16x1xf32> to vector<16x256xf32>
    %127 = arith.mulf %97, %126 : vector<16x256xf32>
    %c0_63 = arith.constant 0 : index
    %c0_64 = arith.constant 0 : index
    %128 = vector.load %arg11[%c0_63, %c0_64] : memref<8x16xf32, #tpu.memory_space<vmem>>, vector<8x16xf32>
    %cst_65 = arith.constant dense<0.000000e+00> : vector<8x256xf32>
    %129 = tpu.matmul %128, %127, %cst_65 {dimension_numbers = #tpu.dot_dimension_numbers<[1], [0], [0], [1], [0, 0, 1, 1], [], []>} : vector<8x16xf32>, vector<16x256xf32>, vector<8x256xf32> -> vector<8x256xf32>
    %c0_66 = arith.constant 0 : index
    %c0_67 = arith.constant 0 : index
    %130 = vector.load %arg12[%c0_66, %c0_67] : memref<8x1xf32, #tpu.memory_space<vmem>>, vector<8x1xf32>
    %131 = vector.broadcast %130 : vector<8x1xf32> to vector<8x256xf32>
    %132 = arith.addf %129, %131 : vector<8x256xf32>
    %133 = arith.addf %132, %1 : vector<8x256xf32>
    %c0_68 = arith.constant 0 : index
    %c0_69 = arith.constant 0 : index
    %c0_70 = arith.constant 0 : index
    %134 = vector.load %arg13[%c0_68, %c0_69, %c0_70] : memref<1x8x256xf32, #tpu.memory_space<vmem>>, vector<1x8x256xf32>
    %135 = vector.shape_cast %134 : vector<1x8x256xf32> to vector<8x256xf32>
    %136 = vector.shape_cast %133 : vector<8x256xf32> to vector<1x8x256xf32>
    tpu.vector_store %arg13[%c0_68, %c0_69, %c0_70], %136 {strides = array<i32>} : memref<1x8x256xf32, #tpu.memory_space<vmem>>, vector<1x8x256xf32>,
    return
  }
  func.func @transform_0(%arg0: i32) -> (i32, i32, i32) {
    %c0_i32 = arith.constant 0 : i32
    %c0_i32_0 = arith.constant 0 : i32
    %c0_i32_1 = arith.constant 0 : i32
    return %arg0, %c0_i32, %c0_i32_0 : i32, i32, i32
  }
  func.func @transform_1(%arg0: i32) -> (i32, i32) {
    %c0_i32 = arith.constant 0 : i32
    %c0_i32_0 = arith.constant 0 : i32
    %c0_i32_1 = arith.constant 0 : i32
    return %c0_i32, %c0_i32_0 : i32, i32
  }
  func.func @transform_2(%arg0: i32) -> (i32, i32) {
    %c0_i32 = arith.constant 0 : i32
    %c0_i32_0 = arith.constant 0 : i32
    %c0_i32_1 = arith.constant 0 : i32
    return %c0_i32, %c0_i32_0 : i32, i32
  }
  func.func @transform_3(%arg0: i32) -> (i32, i32) {
    %c0_i32 = arith.constant 0 : i32
    %c0_i32_0 = arith.constant 0 : i32
    %c0_i32_1 = arith.constant 0 : i32
    return %c0_i32, %c0_i32_0 : i32, i32
  }
  func.func @transform_4(%arg0: i32) -> (i32, i32) {
    %c0_i32 = arith.constant 0 : i32
    %c0_i32_0 = arith.constant 0 : i32
    %c0_i32_1 = arith.constant 0 : i32
    return %c0_i32, %c0_i32_0 : i32, i32
  }
  func.func @transform_5(%arg0: i32) -> (i32, i32) {
    %c0_i32 = arith.constant 0 : i32
    %c0_i32_0 = arith.constant 0 : i32
    %c0_i32_1 = arith.constant 0 : i32
    return %c0_i32, %c0_i32_0 : i32, i32
  }
  func.func @transform_6(%arg0: i32) -> (i32, i32) {
    %c0_i32 = arith.constant 0 : i32
    %c0_i32_0 = arith.constant 0 : i32
    %c0_i32_1 = arith.constant 0 : i32
    return %c0_i32, %c0_i32_0 : i32, i32
  }
  func.func @transform_7(%arg0: i32) -> (i32, i32) {
    %c0_i32 = arith.constant 0 : i32
    %c0_i32_0 = arith.constant 0 : i32
    %c0_i32_1 = arith.constant 0 : i32
    return %c0_i32, %c0_i32_0 : i32, i32
  }
  func.func @transform_8(%arg0: i32) -> (i32, i32) {
    %c0_i32 = arith.constant 0 : i32
    %c0_i32_0 = arith.constant 0 : i32
    %c0_i32_1 = arith.constant 0 : i32
    return %c0_i32, %c0_i32_0 : i32, i32
  }
  func.func @transform_9(%arg0: i32) -> (i32, i32) {
    %c0_i32 = arith.constant 0 : i32
    %c0_i32_0 = arith.constant 0 : i32
    %c0_i32_1 = arith.constant 0 : i32
    return %c0_i32, %c0_i32_0 : i32, i32
  }
  func.func @transform_10(%arg0: i32) -> (i32, i32) {
    %c0_i32 = arith.constant 0 : i32
    %c0_i32_0 = arith.constant 0 : i32
    %c0_i32_1 = arith.constant 0 : i32
    return %c0_i32, %c0_i32_0 : i32, i32
  }
  func.func @transform_11(%arg0: i32) -> (i32, i32) {
    %c0_i32 = arith.constant 0 : i32
    %c0_i32_0 = arith.constant 0 : i32
    %c0_i32_1 = arith.constant 0 : i32
    return %c0_i32, %c0_i32_0 : i32, i32
  }
  func.func @transform_12(%arg0: i32) -> (i32, i32, i32) {
    %c0_i32 = arith.constant 0 : i32
    %c0_i32_0 = arith.constant 0 : i32
    %c0_i32_1 = arith.constant 0 : i32
    return %arg0, %c0_i32, %c0_i32_0 : i32, i32, i32
  }
}

</mosaic_0001>

<llo_original>
// kernel: inverted_residual_forward.1
$region0: #{inverted_residual_forward.1}
  #allocation0 [shape = 'u32[]', space=smem, size = 0x4, offset = 0x4, fixed_abs, tag = 'smem constant byte address 0x4 - core index']
  #allocation1 [shape = 'u32[144,128]{1,0:T(1,128)}', space=vmem, size = 0x12000, scoped, tag = 'internal scratch']
  #allocation2 [shape = 'f32[16,512]{1,0:T(8,128)}', space=vmem, size = 0x8000, scoped, tag = 'scratch operand']
  %s0 = inlined_call_operand.vmem [shape: f32[2,8,256], index: 0, kind: input, shape index: {}]
  %s1 = inlined_call_operand.vmem [shape: f32[16,8], index: 1, kind: input, shape index: {}]
  %s2 = inlined_call_operand.vmem [shape: f32[16,1], index: 2, kind: input, shape index: {}]
  %s3 = inlined_call_operand.vmem [shape: f32[16,9], index: 3, kind: input, shape index: {}]
  %s4 = inlined_call_operand.vmem [shape: f32[16,1], index: 4, kind: input, shape index: {}]
  %s5 = inlined_call_operand.vmem [shape: f32[3,256], index: 5, kind: input, shape index: {}]
  %s6 = inlined_call_operand.vmem [shape: f32[16,8], index: 6, kind: input, shape index: {}]
  %s7 = inlined_call_operand.vmem [shape: f32[1,8], index: 7, kind: input, shape index: {}]
  %s8 = inlined_call_operand.vmem [shape: f32[16,8], index: 8, kind: input, shape index: {}]
  %s9 = inlined_call_operand.vmem [shape: f32[16,1], index: 9, kind: input, shape index: {}]
  %s10 = inlined_call_operand.vmem [shape: f32[8,16], index: 10, kind: input, shape index: {}]
  %s11 = inlined_call_operand.vmem [shape: f32[8,1], index: 11, kind: input, shape index: {}]
  %s12 = inlined_call_operand.vmem [shape: f32[2,8,256], index: 12, kind: output, shape index: {}]
  %s13 = sld [smem:[#allocation0]]
  $region81: #{inverted_residual_forward.1} parent=0
    _
  %s15 = ssub.s32 1, %s13
  %s16 = scalar_select 0, %s15, %s13
  loop: start=0, step=1, limit=4
  $region2: #{inverted_residual_forward.1} parent=0 // loop_pre_header
    _
  $region3: #{inverted_residual_forward.1} parent=0 // loop_header
    %s18 = sphi 0, %s22
    %p19 = scmp.ge.s32.totalorder %s18, 4
    %s28 = sphi 0, %s30
    %s31 = sphi 0, %s28
    %s32 = sphi 0, %s31
    %s48 = sphi 0, %s32
    %s52 = sphi 0, %s52
    %s54 = sphi 0, %s52
    %s55 = sphi 0, %s54
    %s69 = sphi 0, %s55
    %s73 = sphi 0, %s73
    %s75 = sphi 0, %s73
    %s76 = sphi 0, %s75
    %s90 = sphi 0, %s76
    %s94 = sphi 0, %s94
    %s96 = sphi 0, %s94
    %s97 = sphi 0, %s96
    %s111 = sphi 0, %s97
    %s115 = sphi 0, %s115
    %s117 = sphi 0, %s115
    %s118 = sphi 0, %s117
    %s132 = sphi 0, %s118
    %s136 = sphi 0, %s136
    %s138 = sphi 0, %s136
    %s139 = sphi 0, %s138
    %s153 = sphi 0, %s139
    %s157 = sphi 0, %s157
    %s159 = sphi 0, %s157
    %s160 = sphi 0, %s159
    %s174 = sphi 0, %s160
    %s178 = sphi 0, %s178
    %s180 = sphi 0, %s178
    %s181 = sphi 0, %s180
    %s195 = sphi 0, %s181
    %s199 = sphi 0, %s199
    %s201 = sphi 0, %s199
    %s202 = sphi 0, %s201
    %s216 = sphi 0, %s202
    %s220 = sphi 0, %s220
    %s222 = sphi 0, %s220
    %s223 = sphi 0, %s222
    %s237 = sphi 0, %s223
    %s241 = sphi 0, %s241
    %s243 = sphi 0, %s241
    %s244 = sphi 0, %s243
    %s258 = sphi 0, %s244
    %s262 = sphi 0, %s262
    %s264 = sphi 0, %s262
    %s265 = sphi 0, %s264
    %s279 = sphi 0, %s265
    %s285 = sphi 0, %s287
    %s288 = sphi 0, %s285
    %s289 = sphi 0, %s288
    %s305 = sphi 0, %s289
  $region4: #{inverted_residual_forward.1} parent=0 // loop_header_branch
    %21 = sbr.rel (%p19) target = $region8
  $region5: #{inverted_residual_forward.1} parent=0 // loop_body
    %s23 = ssub.s32 %s18, 1
    %s24 = ssub.s32 %s18, 2
    %s25 = sadd.s32 %s18, 1
    %s26 = ssub.s32 %s18, %s25
    %p27 = scmp.eq.s32.totalorder %s26, 0
    %s29 = sadd.s32 %s28, 1
    %s30 = scalar_select %p27, %s28, %s29
    %p33 = pneg %p27
    %p34 = scmp.eq.s32.totalorder %s18, 1
    %p35 = por %p33, %p34
    %p36 = scmp.ne.s32.totalorder %s28, %s31
    %p37 = scmp.eq.s32.totalorder %s18, 0
    %p38 = por %p36, %p37
    %p39 = scmp.ne.s32.totalorder %s28, %s31
    %p40 = scmp.eq.s32.totalorder %s23, 1
    %p41 = por %p39, %p40
    %p42 = scmp.ne.s32.totalorder %s31, %s32
    %p43 = scmp.eq.s32.totalorder %s23, 0
    %p44 = por %p42, %p43
    %p45 = scmp.ne.s32.totalorder %s31, %s32
    %p46 = scmp.eq.s32.totalorder %s24, 1
    %p47 = por %p45, %p46
    %p49 = scmp.ne.s32.totalorder %s32, %s48
    %p50 = scmp.eq.s32.totalorder %s24, 0
    %p51 = por %p49, %p50
    %s53 = sadd.s32 %s52, 1
    %p56 = scmp.eq.s32.totalorder %s18, 1
    %p57 = scmp.ne.s32.totalorder %s52, %s54
    %p58 = scmp.eq.s32.totalorder %s18, 0
    %p59 = por %p57, %p58
    %p60 = scmp.ne.s32.totalorder %s52, %s54
    %p61 = scmp.eq.s32.totalorder %s23, 1
    %p62 = por %p60, %p61
    %p63 = scmp.ne.s32.totalorder %s54, %s55
    %p64 = scmp.eq.s32.totalorder %s23, 0
    %p65 = por %p63, %p64
    %p66 = scmp.ne.s32.totalorder %s54, %s55
    %p67 = scmp.eq.s32.totalorder %s24, 1
    %p68 = por %p66, %p67
    %p70 = scmp.ne.s32.totalorder %s55, %s69
    %p71 = scmp.eq.s32.totalorder %s24, 0
    %p72 = por %p70, %p71
    %s74 = sadd.s32 %s73, 1
    %p77 = scmp.eq.s32.totalorder %s18, 1
    %p78 = scmp.ne.s32.totalorder %s73, %s75
    %p79 = scmp.eq.s32.totalorder %s18, 0
    %p80 = por %p78, %p79
    %p81 = scmp.ne.s32.totalorder %s73, %s75
    %p82 = scmp.eq.s32.totalorder %s23, 1
    %p83 = por %p81, %p82
    %p84 = scmp.ne.s32.totalorder %s75, %s76
    %p85 = scmp.eq.s32.totalorder %s23, 0
    %p86 = por %p84, %p85
    %p87 = scmp.ne.s32.totalorder %s75, %s76
    %p88 = scmp.eq.s32.totalorder %s24, 1
    %p89 = por %p87, %p88
    %p91 = scmp.ne.s32.totalorder %s76, %s90
    %p92 = scmp.eq.s32.totalorder %s24, 0
    %p93 = por %p91, %p92
    %s95 = sadd.s32 %s94, 1
    %p98 = scmp.eq.s32.totalorder %s18, 1
    %p99 = scmp.ne.s32.totalorder %s94, %s96
    %p100 = scmp.eq.s32.totalorder %s18, 0
    %p101 = por %p99, %p100
    %p102 = scmp.ne.s32.totalorder %s94, %s96
    %p103 = scmp.eq.s32.totalorder %s23, 1
    %p104 = por %p102, %p103
    %p105 = scmp.ne.s32.totalorder %s96, %s97
    %p106 = scmp.eq.s32.totalorder %s23, 0
    %p107 = por %p105, %p106
    %p108 = scmp.ne.s32.totalorder %s96, %s97
    %p109 = scmp.eq.s32.totalorder %s24, 1
    %p110 = por %p108, %p109
    %p112 = scmp.ne.s32.totalorder %s97, %s111
    %p113 = scmp.eq.s32.totalorder %s24, 0
    %p114 = por %p112, %p113
    %s116 = sadd.s32 %s115, 1
    %p119 = scmp.eq.s32.totalorder %s18, 1
    %p120 = scmp.ne.s32.totalorder %s115, %s117
    %p121 = scmp.eq.s32.totalorder %s18, 0
    %p122 = por %p120, %p121
    %p123 = scmp.ne.s32.totalorder %s115, %s117
    %p124 = scmp.eq.s32.totalorder %s23, 1
    %p125 = por %p123, %p124
    %p126 = scmp.ne.s32.totalorder %s117, %s118
    %p127 = scmp.eq.s32.totalorder %s23, 0
    %p128 = por %p126, %p127
    %p129 = scmp.ne.s32.totalorder %s117, %s118
    %p130 = scmp.eq.s32.totalorder %s24, 1
    %p131 = por %p129, %p130
    %p133 = scmp.ne.s32.totalorder %s118, %s132
    %p134 = scmp.eq.s32.totalorder %s24, 0
    %p135 = por %p133, %p134
    %s137 = sadd.s32 %s136, 1
    %p140 = scmp.eq.s32.totalorder %s18, 1
    %p141 = scmp.ne.s32.totalorder %s136, %s138
    %p142 = scmp.eq.s32.totalorder %s18, 0
    %p143 = por %p141, %p142
    %p144 = scmp.ne.s32.totalorder %s136, %s138
    %p145 = scmp.eq.s32.totalorder %s23, 1
    %p146 = por %p144, %p145
    %p147 = scmp.ne.s32.totalorder %s138, %s139
    %p148 = scmp.eq.s32.totalorder %s23, 0
    %p149 = por %p147, %p148
    %p150 = scmp.ne.s32.totalorder %s138, %s139
    %p151 = scmp.eq.s32.totalorder %s24, 1
    %p152 = por %p150, %p151
    %p154 = scmp.ne.s32.totalorder %s139, %s153
    %p155 = scmp.eq.s32.totalorder %s24, 0
    %p156 = por %p154, %p155
    %s158 = sadd.s32 %s157, 1
    %p161 = scmp.eq.s32.totalorder %s18, 1
    %p162 = scmp.ne.s32.totalorder %s157, %s159
    %p163 = scmp.eq.s32.totalorder %s18, 0
    %p164 = por %p162, %p163
    %p165 = scmp.ne.s32.totalorder %s157, %s159
    %p166 = scmp.eq.s32.totalorder %s23, 1
    %p167 = por %p165, %p166
    %p168 = scmp.ne.s32.totalorder %s159, %s160
    %p169 = scmp.eq.s32.totalorder %s23, 0
    %p170 = por %p168, %p169
    %p171 = scmp.ne.s32.totalorder %s159, %s160
    %p172 = scmp.eq.s32.totalorder %s24, 1
    %p173 = por %p171, %p172
    %p175 = scmp.ne.s32.totalorder %s160, %s174
    %p176 = scmp.eq.s32.totalorder %s24, 0
    %p177 = por %p175, %p176
    %s179 = sadd.s32 %s178, 1
    %p182 = scmp.eq.s32.totalorder %s18, 1
    %p183 = scmp.ne.s32.totalorder %s178, %s180
    %p184 = scmp.eq.s32.totalorder %s18, 0
    %p185 = por %p183, %p184
    %p186 = scmp.ne.s32.totalorder %s178, %s180
    %p187 = scmp.eq.s32.totalorder %s23, 1
    %p188 = por %p186, %p187
    %p189 = scmp.ne.s32.totalorder %s180, %s181
    %p190 = scmp.eq.s32.totalorder %s23, 0
    %p191 = por %p189, %p190
    %p192 = scmp.ne.s32.totalorder %s180, %s181
    %p193 = scmp.eq.s32.totalorder %s24, 1
    %p194 = por %p192, %p193
    %p196 = scmp.ne.s32.totalorder %s181, %s195
    %p197 = scmp.eq.s32.totalorder %s24, 0
    %p198 = por %p196, %p197
    %s200 = sadd.s32 %s199, 1
    %p203 = scmp.eq.s32.totalorder %s18, 1
    %p204 = scmp.ne.s32.totalorder %s199, %s201
    %p205 = scmp.eq.s32.totalorder %s18, 0
    %p206 = por %p204, %p205
    %p207 = scmp.ne.s32.totalorder %s199, %s201
    %p208 = scmp.eq.s32.totalorder %s23, 1
    %p209 = por %p207, %p208
    %p210 = scmp.ne.s32.totalorder %s201, %s202
    %p211 = scmp.eq.s32.totalorder %s23, 0
    %p212 = por %p210, %p211
    %p213 = scmp.ne.s32.totalorder %s201, %s202
    %p214 = scmp.eq.s32.totalorder %s24, 1
    %p215 = por %p213, %p214
    %p217 = scmp.ne.s32.totalorder %s202, %s216
    %p218 = scmp.eq.s32.totalorder %s24, 0
    %p219 = por %p217, %p218
    %s221 = sadd.s32 %s220, 1
    %p224 = scmp.eq.s32.totalorder %s18, 1
    %p225 = scmp.ne.s32.totalorder %s220, %s222
    %p226 = scmp.eq.s32.totalorder %s18, 0
    %p227 = por %p225, %p226
    %p228 = scmp.ne.s32.totalorder %s220, %s222
    %p229 = scmp.eq.s32.totalorder %s23, 1
    %p230 = por %p228, %p229
    %p231 = scmp.ne.s32.totalorder %s222, %s223
    %p232 = scmp.eq.s32.totalorder %s23, 0
    %p233 = por %p231, %p232
    %p234 = scmp.ne.s32.totalorder %s222, %s223
    %p235 = scmp.eq.s32.totalorder %s24, 1
    %p236 = por %p234, %p235
    %p238 = scmp.ne.s32.totalorder %s223, %s237
    %p239 = scmp.eq.s32.totalorder %s24, 0
    %p240 = por %p238, %p239
    %s242 = sadd.s32 %s241, 1
    %p245 = scmp.eq.s32.totalorder %s18, 1
    %p246 = scmp.ne.s32.totalorder %s241, %s243
    %p247 = scmp.eq.s32.totalorder %s18, 0
    %p248 = por %p246, %p247
    %p249 = scmp.ne.s32.totalorder %s241, %s243
    %p250 = scmp.eq.s32.totalorder %s23, 1
    %p251 = por %p249, %p250
    %p252 = scmp.ne.s32.totalorder %s243, %s244
    %p253 = scmp.eq.s32.totalorder %s23, 0
    %p254 = por %p252, %p253
    %p255 = scmp.ne.s32.totalorder %s243, %s244
    %p256 = scmp.eq.s32.totalorder %s24, 1
    %p257 = por %p255, %p256
    %p259 = scmp.ne.s32.totalorder %s244, %s258
    %p260 = scmp.eq.s32.totalorder %s24, 0
    %p261 = por %p259, %p260
    %s263 = sadd.s32 %s262, 1
    %p266 = scmp.eq.s32.totalorder %s18, 1
    %p267 = scmp.ne.s32.totalorder %s262, %s264
    %p268 = scmp.eq.s32.totalorder %s18, 0
    %p269 = por %p267, %p268
    %p270 = scmp.ne.s32.totalorder %s262, %s264
    %p271 = scmp.eq.s32.totalorder %s23, 1
    %p272 = por %p270, %p271
    %p273 = scmp.ne.s32.totalorder %s264, %s265
    %p274 = scmp.eq.s32.totalorder %s23, 0
    %p275 = por %p273, %p274
    %p276 = scmp.ne.s32.totalorder %s264, %s265
    %p277 = scmp.eq.s32.totalorder %s24, 1
    %p278 = por %p276, %p277
    %p280 = scmp.ne.s32.totalorder %s265, %s279
    %p281 = scmp.eq.s32.totalorder %s24, 0
    %p282 = por %p280, %p281
    %s283 = ssub.s32 %s18, %s25
    %p284 = scmp.eq.s32.totalorder %s283, 0
    %s286 = sadd.s32 %s285, 1
    %s287 = scalar_select %p284, %s285, %s286
    %p290 = pneg %p284
    %p291 = scmp.eq.s32.totalorder %s18, 1
    %p292 = por %p290, %p291
    %p293 = scmp.ne.s32.totalorder %s285, %s288
    %p294 = scmp.eq.s32.totalorder %s18, 0
    %p295 = por %p293, %p294
    %p296 = scmp.ne.s32.totalorder %s285, %s288
    %p297 = scmp.eq.s32.totalorder %s23, 1
    %p298 = por %p296, %p297
    %p299 = scmp.ne.s32.totalorder %s288, %s289
    %p300 = scmp.eq.s32.totalorder %s23, 0
    %p301 = por %p299, %p300
    %p302 = scmp.ne.s32.totalorder %s288, %s289
    %p303 = scmp.eq.s32.totalorder %s24, 1
    %p304 = por %p302, %p303
    %p306 = scmp.ne.s32.totalorder %s289, %s305
    %p307 = scmp.eq.s32.totalorder %s24, 0
    %p308 = por %p306, %p307
    %p309 = scmp.le.s32.totalorder 1, %s18
    %p310 = scmp.lt.s32.totalorder %s18, 3
    %p311 = pnand %p309, %p310
    %p312 = pneg %p311
    // Predicated region
    $region9: #{inverted_residual_forward.1} parent=5 // pred_check
      _
    $region10: #{inverted_residual_forward.1} parent=5 // pred_check_branch
      %314 = sbr.rel (%p311) target = $region12
    $region11: #{inverted_residual_forward.1} parent=5 // pred_region
      %s315 = ssub.s32 %s18, 1
      // Predicated region
      $region13: #{inverted_residual_forward.1} parent=11 // pred_check
        %p316 = pneg %p65
      $region14: #{inverted_residual_forward.1} parent=11 // pred_check_branch
        %318 = sbr.rel (%p316) target = $region16
      $region15: #{inverted_residual_forward.1} parent=11 // pred_region
        _
      $region16: #{inverted_residual_forward.1} parent=11 // pred_fallthru
        _
      // Predicated region
      $region17: #{inverted_residual_forward.1} parent=11 // pred_check
        %p319 = pneg %p86
      $region18: #{inverted_residual_forward.1} parent=11 // pred_check_branch
        %321 = sbr.rel (%p319) target = $region20
      $region19: #{inverted_residual_forward.1} parent=11 // pred_region
        _
      $region20: #{inverted_residual_forward.1} parent=11 // pred_fallthru
        _
      // Predicated region
      $region21: #{inverted_residual_forward.1} parent=11 // pred_check
        %p322 = pneg %p107
      $region22: #{inverted_residual_forward.1} parent=11 // pred_check_branch
        %324 = sbr.rel (%p322) target = $region24
      $region23: #{inverted_residual_forward.1} parent=11 // pred_region
        _
      $region24: #{inverted_residual_forward.1} parent=11 // pred_fallthru
        _
      // Predicated region
      $region25: #{inverted_residual_forward.1} parent=11 // pred_check
        %p325 = pneg %p128
      $region26: #{inverted_residual_forward.1} parent=11 // pred_check_branch
        %327 = sbr.rel (%p325) target = $region28
      $region27: #{inverted_residual_forward.1} parent=11 // pred_region
        _
      $region28: #{inverted_residual_forward.1} parent=11 // pred_fallthru
        _
      // Predicated region
      $region29: #{inverted_residual_forward.1} parent=11 // pred_check
        %p328 = pneg %p149
      $region30: #{inverted_residual_forward.1} parent=11 // pred_check_branch
        %330 = sbr.rel (%p328) target = $region32
      $region31: #{inverted_residual_forward.1} parent=11 // pred_region
        _
      $region32: #{inverted_residual_forward.1} parent=11 // pred_fallthru
        _
      // Predicated region
      $region33: #{inverted_residual_forward.1} parent=11 // pred_check
        %p331 = pneg %p170
      $region34: #{inverted_residual_forward.1} parent=11 // pred_check_branch
        %333 = sbr.rel (%p331) target = $region36
      $region35: #{inverted_residual_forward.1} parent=11 // pred_region
        _
      $region36: #{inverted_residual_forward.1} parent=11 // pred_fallthru
        _
      // Predicated region
      $region37: #{inverted_residual_forward.1} parent=11 // pred_check
        %p334 = pneg %p191
      $region38: #{inverted_residual_forward.1} parent=11 // pred_check_branch
        %336 = sbr.rel (%p334) target = $region40
      $region39: #{inverted_residual_forward.1} parent=11 // pred_region
        _
      $region40: #{inverted_residual_forward.1} parent=11 // pred_fallthru
        _
      // Predicated region
      $region41: #{inverted_residual_forward.1} parent=11 // pred_check
        %p337 = pneg %p212
      $region42: #{inverted_residual_forward.1} parent=11 // pred_check_branch
        %339 = sbr.rel (%p337) target = $region44
      $region43: #{inverted_residual_forward.1} parent=11 // pred_region
        _
      $region44: #{inverted_residual_forward.1} parent=11 // pred_fallthru
        _
      // Predicated region
      $region45: #{inverted_residual_forward.1} parent=11 // pred_check
        %p340 = pneg %p233
      $region46: #{inverted_residual_forward.1} parent=11 // pred_check_branch
        %342 = sbr.rel (%p340) target = $region48
      $region47: #{inverted_residual_forward.1} parent=11 // pred_region
        _
      $region48: #{inverted_residual_forward.1} parent=11 // pred_fallthru
        _
      // Predicated region
      $region49: #{inverted_residual_forward.1} parent=11 // pred_check
        %p343 = pneg %p254
      $region50: #{inverted_residual_forward.1} parent=11 // pred_check_branch
        %345 = sbr.rel (%p343) target = $region52
      $region51: #{inverted_residual_forward.1} parent=11 // pred_region
        _
      $region52: #{inverted_residual_forward.1} parent=11 // pred_fallthru
        _
      // Predicated region
      $region53: #{inverted_residual_forward.1} parent=11 // pred_check
        %p346 = pneg %p275
      $region54: #{inverted_residual_forward.1} parent=11 // pred_check_branch
        %348 = sbr.rel (%p346) target = $region56
      $region55: #{inverted_residual_forward.1} parent=11 // pred_region
        _
      $region56: #{inverted_residual_forward.1} parent=11 // pred_fallthru
        _
    $region12: #{inverted_residual_forward.1} parent=5 // pred_fallthru
      _
    %p349 = scmp.lt.s32.totalorder %s18, 2
    // Predicated region
    $region57: #{inverted_residual_forward.1} parent=5 // pred_check
      %p350 = pneg %p349
    $region58: #{inverted_residual_forward.1} parent=5 // pred_check_branch
      %352 = sbr.rel (%p350) target = $region60
    $region59: #{inverted_residual_forward.1} parent=5 // pred_region
      // Predicated region
      $region61: #{inverted_residual_forward.1} parent=59 // pred_check
        %p353 = pneg %p38
      $region62: #{inverted_residual_forward.1} parent=59 // pred_check_branch
        %355 = sbr.rel (%p353) target = $region64
      $region63: #{inverted_residual_forward.1} parent=59 // pred_region
        %p356 = scmp.lt.s32.totalorder %s18, 1
        %s357 = scalar_select %p356, %s18, 1
        %s358 = smul.addr %s357, 2
        %s359 = smul.addr %s358, 8
        %s360 = scalar_lea.vmem %s0, %s359
      $region64: #{inverted_residual_forward.1} parent=59 // pred_fallthru
        _
    $region60: #{inverted_residual_forward.1} parent=5 // pred_fallthru
      _
    %p361 = scmp.le.s32.totalorder 1, %s18
    %p362 = scmp.lt.s32.totalorder %s18, 3
    %p363 = pnand %p361, %p362
    %p364 = pneg %p363
    // Predicated region
    $region65: #{inverted_residual_forward.1} parent=5 // pred_check
      _
    $region66: #{inverted_residual_forward.1} parent=5 // pred_check_branch
      %366 = sbr.rel (%p363) target = $region68
    $region67: #{inverted_residual_forward.1} parent=5 // pred_region
      %s367 = ssub.s32 %s18, 1
      %p368 = scmp.lt.s32.totalorder %s23, 1
      %s369 = scalar_select %p368, %s23, 1
      %s370 = smul.addr %s369, 2
      %s371 = smul.addr %s370, 8
      %s372 = scalar_lea.vmem %s0, %s371
      %p373 = pneg %p44
      %p374 = pneg %p41
      %p375 = pneg %p65
      %p376 = pneg %p62
      %p377 = pneg %p86
      %p378 = pneg %p83
      %p379 = pneg %p107
      %p380 = pneg %p104
      %p381 = pneg %p128
      %p382 = pneg %p125
      %p383 = pneg %p149
      %p384 = pneg %p146
      %p385 = pneg %p170
      %p386 = pneg %p167
      %p387 = pneg %p191
      %p388 = pneg %p188
      %p389 = pneg %p212
      %p390 = pneg %p209
      %p391 = pneg %p233
      %p392 = pneg %p230
      %p393 = pneg %p254
      %p394 = pneg %p251
      %p395 = pneg %p275
      %p396 = pneg %p272
      %p397 = pneg %p301
      %p398 = pneg %p298
      %p399 = scmp.lt.s32.totalorder %s23, 1
      %s400 = scalar_select %p399, %s23, 1
      %s401 = smul.addr %s400, 2
      %s402 = smul.addr %s401, 8
      %s403 = scalar_lea.vmem %s12, %s402
      %p404 = scmp.lt.s32.totalorder %s23, 1
      %s405 = scalar_select %p404, %s23, 1
      %s406 = smul.addr %s405, 2
      %s407 = smul.addr %s406, 8
      %s408 = scalar_lea.vmem %s0, %s407
      %p409 = scmp.lt.s32.totalorder %s23, 1
      %s410 = scalar_select %p409, %s23, 1
      %s411 = smul.addr %s410, 2
      %s412 = smul.addr %s411, 8
      %s413 = scalar_lea.vmem %s12, %s412
      %v414 = vld [vmem:[%s408] sm:$0xff]
      %v415 = vld [vmem:[%s408 + $0x8] sm:$0xff]
      %v416 = vld [vmem:[%s1] sm:$0xff]
      %v417 = vld [vmem:[%s1 + $0x8] sm:$0xff]
      %v418 = vld [vmem:[%s2] sm:$0xff]
      %v419 = vld [vmem:[%s2 + $0x8] sm:$0xff]
      %421 = vset.pattern.permute.xlu0 0
      %422 = vperm.xlu0 %421, %v418
      %v423 = vpop.permute.xlu0 %422
      %426 = vset.pattern.permute.xlu0 0
      %427 = vperm.xlu0 %426, %v419
      %v428 = vpop.permute.xlu0 %427
      %vm430 = vcmask 64512
      %v432 = vsel %vm430, %v416, 0
      %v435 = vsel %vm430, %v417, 0
      %437 = vmatprep.subr.mxu0 %v415
      %438 = vmatpush1.msra.mxu0 %v414
      %439 = vmatprep.subr.mxu0 0.0
      %440 = vmatpush1.msra.mxu0 0.0
      %441 = vmatprep.subr.mxu0 0.0
      %442 = vmatpush1.msra.mxu0 0.0
      %443 = vmatprep.subr.mxu0 0.0
      %444 = vmatpush1.msra.mxu0 0.0
      %445 = vmatprep.subr.mxu0 0.0
      %446 = vmatpush1.msra.mxu0 0.0
      %447 = vmatprep.subr.mxu0 0.0
      %448 = vmatpush1.msra.mxu0 0.0
      %449 = vmatprep.subr.mxu0 0.0
      %450 = vmatpush1.msra.mxu0 0.0
      %451 = vmatprep.subr.mxu0 0.0
      %452 = vmatpush1.msra.mxu0 0.0
      %453 = vmatprep.subr.mxu0 0.0
      %454 = vmatpush1.msra.mxu0 0.0
      %455 = vmatprep.subr.mxu0 0.0
      %456 = vmatpush1.msra.mxu0 0.0
      %457 = vmatprep.subr.mxu0 0.0
      %458 = vmatpush1.msra.mxu0 0.0
      %459 = vmatprep.subr.mxu0 0.0
      %460 = vmatpush1.msra.mxu0 0.0
      %461 = vmatprep.subr.mxu0 0.0
      %462 = vmatpush1.msra.mxu0 0.0
      %463 = vmatprep.subr.mxu0 0.0
      %464 = vmatpush1.msra.mxu0 0.0
      %465 = vmatprep.subr.mxu0 0.0
      %466 = vmatpush1.msra.mxu0 0.0
      %467 = vmatprep.subr.mxu0 0.0
      %468 = vmatpush1.msra.mxu0 0.0
      %469 = vmatprep.subr.mxu0 0.0
      %470 = vmatpush1.msra.mxu0 0.0
      %471 = vmatprep.subr.mxu0 0.0
      %472 = vmatpush1.msra.mxu0 0.0
      %473 = vmatprep.subr.mxu0 0.0
      %474 = vmatpush1.msra.mxu0 0.0
      %475 = vmatprep.subr.mxu0 0.0
      %476 = vmatpush1.msra.mxu0 0.0
      %477 = vmatprep.subr.mxu0 0.0
      %478 = vmatpush1.msra.mxu0 0.0
      %479 = vmatprep.subr.mxu0 0.0
      %480 = vmatpush1.msra.mxu0 0.0
      %481 = vmatprep.subr.mxu0 0.0
      %482 = vmatpush1.msra.mxu0 0.0
      %483 = vmatprep.subr.mxu0 0.0
      %484 = vmatpush1.msra.mxu0 0.0
      %485 = vmatprep.subr.mxu0 0.0
      %486 = vmatpush1.msra.mxu0 0.0
      %487 = vmatprep.subr.mxu0 0.0
      %488 = vmatpush1.msra.mxu0 0.0
      %489 = vmatprep.subr.mxu0 0.0
      %490 = vmatpush1.msra.mxu0 0.0
      %491 = vmatprep.subr.mxu0 0.0
      %492 = vmatpush1.msra.mxu0 0.0
      %493 = vmatprep.subr.mxu0 0.0
      %494 = vmatpush1.msra.mxu0 0.0
      %495 = vmatprep.subr.mxu0 0.0
      %496 = vmatpush1.msra.mxu0 0.0
      %497 = vmatprep.subr.mxu0 0.0
      %498 = vmatpush1.msra.mxu0 0.0
      %499 = vmatprep.subr.mxu0 0.0
      %500 = vmatpush1.msra.mxu0 0.0
      %501 = vmatprep.mubr.f32.mxu0 0.0
      %502 = vmatmul.mubr.f32.gmra.mrb[0].mxu0 %v432
      %v503 = vpop.f32.mrb[0].mxu0
      %v504 = vadd.f32 %v423, %v503
      %v505 = vpop.f32.mrb[0].mxu0
      %v506 = vadd.f32 %v423, %v505
      %507 = vmatprep.mubr.f32.mxu0 0.0
      %508 = vmatmul.mubr.f32.gmra.mrb[0].mxu0 %v435
      %v509 = vpop.f32.mrb[0].mxu0
      %v510 = vadd.f32 %v428, %v509
      %v511 = vpop.f32.mrb[0].mxu0
      %v512 = vadd.f32 %v428, %v511
      %513 = vdwg.mxu0
      %v514 = vadd.f32 %v504, 3.0
      %v515 = vadd.f32 %v506, 3.0
      %v516 = vadd.f32 %v510, 3.0
      %v517 = vadd.f32 %v512, 3.0
      %v518 = vmax.f32 %v514, 0.0
      %v519 = vmax.f32 %v515, 0.0
      %v520 = vmax.f32 %v516, 0.0
      %v521 = vmax.f32 %v517, 0.0
      %v522 = vmin.f32 %v518, 6.0
      %v523 = vmin.f32 %v519, 6.0
      %v524 = vmin.f32 %v520, 6.0
      %v525 = vmin.f32 %v521, 6.0
      %v526 = vmul.f32 %v504, %v522
      %v527 = vmul.f32 %v506, %v523
      %v528 = vmul.f32 %v510, %v524
      %v529 = vmul.f32 %v512, %v525
      %v530 = vmul.f32 %v526, 0.16666667
      %v531 = vmul.f32 %v527, 0.16666667
      %v532 = vmul.f32 %v528, 0.16666667
      %v533 = vmul.f32 %v529, 0.16666667
      %534 = vst [vmem:[#allocation2] sm:$0xff] 0.0
      %535 = vst [vmem:[#allocation2 + $0x20] sm:$0xff] 0.0
      %536 = vst [vmem:[#allocation2 + $0x18] sm:$0xff] 0.0
      %537 = vst [vmem:[#allocation2 + $0x38] sm:$0xff] 0.0
      %538 = vst [vmem:[#allocation2 + $0x8] sm:$0xff] %v530
      %539 = vst [vmem:[#allocation2 + $0x10] sm:$0xff] %v531
      %540 = vst [vmem:[#allocation2 + $0x28] sm:$0xff] %v532
      %541 = vst [vmem:[#allocation2 + $0x30] sm:$0xff] %v533
      %v542 = vld [vmem:[%s3] sm:$0xff]
      %v543 = vld [vmem:[%s3 + $0x8] sm:$0xff]
      %v544 = vld [vmem:[#allocation2] sm:$0xff]
      %v545 = vld [vmem:[#allocation2 + $0x8] sm:$0xff]
      %v546 = vld [vmem:[#allocation2 + $0x10] sm:$0xff]
      %v547 = vld [vmem:[#allocation2 + $0x20] sm:$0xff]
      %v548 = vld [vmem:[#allocation2 + $0x28] sm:$0xff]
      %v549 = vld [vmem:[#allocation2 + $0x30] sm:$0xff]
      %v550 = vld [vmem:[%s5] ss:$4 sm:$0x3]
      %v552 = vlaneseq
      %v553 = vshrl.u32 %v552, 7
      %v554 = vsub.s32 0, %v553
      %v555 = vrot.slane %v550, %v554
      %v556 = vlaneseq
      %v557 = vshrl.u32 %v556, 7
      %v558 = vsub.s32 1, %v557
      %v559 = vrot.slane %v550, %v558
      %560 = vrot.lane.b32.xlu0 %v555, 111
      %v561 = vpop.permute.xlu0 %560
      %562 = vrot.lane.b32.xlu0 %v559, 111
      %v563 = vpop.permute.xlu0 %562
      %vm564 = vcmask 908288
      %v565 = vsel %vm564, %v561, %v563
      %v569 = vmul.f32 %v544, %v561
      %v570 = vmul.f32 %v545, %v565
      %v571 = vmul.f32 %v546, %v563
      %v572 = vmul.f32 %v547, %v561
      %v573 = vmul.f32 %v548, %v565
      %v574 = vmul.f32 %v549, %v563
      %576 = vset.pattern.permute.xlu0 0
      %577 = vperm.xlu0 %576, %v542
      %v578 = vpop.permute.xlu0 %577
      %581 = vset.pattern.permute.xlu0 0
      %582 = vperm.xlu0 %581, %v543
      %v583 = vpop.permute.xlu0 %582
      %v585 = vmul.f32 %v569, %v578
      %v586 = vmul.f32 %v570, %v578
      %v587 = vmul.f32 %v571, %v578
      %v588 = vmul.f32 %v572, %v583
      %v589 = vmul.f32 %v573, %v583
      %v590 = vmul.f32 %v574, %v583
      %v591 = vadd.f32 %v585, 0.0
      %v592 = vadd.f32 %v586, 0.0
      %v593 = vadd.f32 %v587, 0.0
      %v594 = vadd.f32 %v588, 0.0
      %v595 = vadd.f32 %v589, 0.0
      %v596 = vadd.f32 %v590, 0.0
      %597 = vset.pattern.permute.xlu0 1
      %598 = vperm.xlu0 %597, %v542
      %v599 = vpop.permute.xlu0 %598
      %601 = vset.pattern.permute.xlu0 1
      %602 = vperm.xlu0 %601, %v543
      %v603 = vpop.permute.xlu0 %602
      %v605 = vmul.f32 %v544, %v599
      %v606 = vmul.f32 %v545, %v599
      %v607 = vmul.f32 %v546, %v599
      %v608 = vmul.f32 %v547, %v603
      %v609 = vmul.f32 %v548, %v603
      %v610 = vmul.f32 %v549, %v603
      %617 = vrot.lane.b32.xlu0 %v605, 127
      %v618 = vpop.permute.xlu0 %617
      %619 = vrot.lane.b32.xlu0 %v606, 127
      %v620 = vpop.permute.xlu0 %619
      %621 = vrot.lane.b32.xlu0 %v607, 127
      %v622 = vpop.permute.xlu0 %621
      %623 = vrot.lane.b32.xlu0 %v608, 127
      %v624 = vpop.permute.xlu0 %623
      %625 = vrot.lane.b32.xlu0 %v609, 127
      %v626 = vpop.permute.xlu0 %625
      %627 = vrot.lane.b32.xlu0 %v610, 127
      %v628 = vpop.permute.xlu0 %627
      %vm629 = vcmask 1039360
      %v630 = vsel %vm629, %v618, %v620
      %v631 = vsel %vm629, %v620, %v622
      %v632 = vsel %vm629, %v624, %v626
      %v633 = vsel %vm629, %v626, %v628
      %v640 = vadd.f32 %v591, %v630
      %v641 = vadd.f32 %v592, %v631
      %v642 = vadd.f32 %v593, %v622
      %v643 = vadd.f32 %v594, %v632
      %v644 = vadd.f32 %v595, %v633
      %v645 = vadd.f32 %v596, %v628
      %s646 = scalar_lea.vmem %s5, 2
      %v647 = vld [vmem:[%s646] ss:$4 sm:$0x3]
      %v649 = vlaneseq
      %v650 = vshrl.u32 %v649, 7
      %v651 = vsub.s32 0, %v650
      %v652 = vrot.slane %v647, %v651
      %v653 = vlaneseq
      %v654 = vshrl.u32 %v653, 7
      %v655 = vsub.s32 1, %v654
      %v656 = vrot.slane %v647, %v655
      %657 = vrot.lane.b32.xlu0 %v652, 113
      %v658 = vpop.permute.xlu0 %657
      %659 = vrot.lane.b32.xlu0 %v656, 113
      %v660 = vpop.permute.xlu0 %659
      %vm661 = vcmask 924672
      %v662 = vsel %vm661, %v658, %v660
      %v666 = vmul.f32 %v544, %v658
      %v667 = vmul.f32 %v545, %v662
      %v668 = vmul.f32 %v546, %v660
      %v669 = vmul.f32 %v547, %v658
      %v670 = vmul.f32 %v548, %v662
      %v671 = vmul.f32 %v549, %v660
      %672 = vset.pattern.permute.xlu0 2
      %673 = vperm.xlu0 %672, %v542
      %v674 = vpop.permute.xlu0 %673
      %676 = vset.pattern.permute.xlu0 2
      %677 = vperm.xlu0 %676, %v543
      %v678 = vpop.permute.xlu0 %677
      %v680 = vmul.f32 %v666, %v674
      %v681 = vmul.f32 %v667, %v674
      %v682 = vmul.f32 %v668, %v674
      %v683 = vmul.f32 %v669, %v678
      %v684 = vmul.f32 %v670, %v678
      %v685 = vmul.f32 %v671, %v678
      %692 = vrot.lane.b32.xlu0 %v680, 126
      %v693 = vpop.permute.xlu0 %692
      %694 = vrot.lane.b32.xlu0 %v681, 126
      %v695 = vpop.permute.xlu0 %694
      %696 = vrot.lane.b32.xlu0 %v682, 126
      %v697 = vpop.permute.xlu0 %696
      %698 = vrot.lane.b32.xlu0 %v683, 126
      %v699 = vpop.permute.xlu0 %698
      %700 = vrot.lane.b32.xlu0 %v684, 126
      %v701 = vpop.permute.xlu0 %700
      %702 = vrot.lane.b32.xlu0 %v685, 126
      %v703 = vpop.permute.xlu0 %702
      %vm704 = vcmask 1031168
      %v705 = vsel %vm704, %v693, %v695
      %v706 = vsel %vm704, %v695, %v697
      %v707 = vsel %vm704, %v699, %v701
      %v708 = vsel %vm704, %v701, %v703
      %v715 = vadd.f32 %v640, %v705
      %v716 = vadd.f32 %v641, %v706
      %v717 = vadd.f32 %v642, %v697
      %v718 = vadd.f32 %v643, %v707
      %v719 = vadd.f32 %v644, %v708
      %v720 = vadd.f32 %v645, %v703
      %721 = vrot.lane.b32.xlu0 %v555, 127
      %v722 = vpop.permute.xlu0 %721
      %723 = vrot.lane.b32.xlu0 %v559, 127
      %v724 = vpop.permute.xlu0 %723
      %v725 = vsel %vm629, %v722, %v724
      %v729 = vmul.f32 %v544, %v722
      %v730 = vmul.f32 %v545, %v725
      %v731 = vmul.f32 %v546, %v724
      %v732 = vmul.f32 %v547, %v722
      %v733 = vmul.f32 %v548, %v725
      %v734 = vmul.f32 %v549, %v724
      %735 = vset.pattern.permute.xlu0 3
      %736 = vperm.xlu0 %735, %v542
      %v737 = vpop.permute.xlu0 %736
      %739 = vset.pattern.permute.xlu0 3
      %740 = vperm.xlu0 %739, %v543
      %v741 = vpop.permute.xlu0 %740
      %v743 = vmul.f32 %v729, %v737
      %v744 = vmul.f32 %v730, %v737
      %v745 = vmul.f32 %v731, %v737
      %v746 = vmul.f32 %v732, %v741
      %v747 = vmul.f32 %v733, %v741
      %v748 = vmul.f32 %v734, %v741
      %755 = vrot.lane.b32.xlu0 %v743, 112
      %v756 = vpop.permute.xlu0 %755
      %757 = vrot.lane.b32.xlu0 %v744, 112
      %v758 = vpop.permute.xlu0 %757
      %759 = vrot.lane.b32.xlu0 %v745, 112
      %v760 = vpop.permute.xlu0 %759
      %761 = vrot.lane.b32.xlu0 %v746, 112
      %v762 = vpop.permute.xlu0 %761
      %763 = vrot.lane.b32.xlu0 %v747, 112
      %v764 = vpop.permute.xlu0 %763
      %765 = vrot.lane.b32.xlu0 %v748, 112
      %v766 = vpop.permute.xlu0 %765
      %vm767 = vcmask 916480
      %v768 = vsel %vm767, %v756, %v758
      %v769 = vsel %vm767, %v758, %v760
      %v770 = vsel %vm767, %v762, %v764
      %v771 = vsel %vm767, %v764, %v766
      %v778 = vadd.f32 %v715, %v768
      %v779 = vadd.f32 %v716, %v769
      %v780 = vadd.f32 %v717, %v760
      %v781 = vadd.f32 %v718, %v770
      %v782 = vadd.f32 %v719, %v771
      %v783 = vadd.f32 %v720, %v766
      %784 = vset.pattern.permute.xlu0 4
      %785 = vperm.xlu0 %784, %v542
      %v786 = vpop.permute.xlu0 %785
      %788 = vset.pattern.permute.xlu0 4
      %789 = vperm.xlu0 %788, %v543
      %v790 = vpop.permute.xlu0 %789
      %v792 = vmul.f32 %v545, %v786
      %v793 = vmul.f32 %v546, %v786
      %v794 = vmul.f32 %v548, %v790
      %v795 = vmul.f32 %v549, %v790
      %800 = vrot.lane.b32.xlu0 %v792, 111
      %v801 = vpop.permute.xlu0 %800
      %802 = vrot.lane.b32.xlu0 %v793, 111
      %v803 = vpop.permute.xlu0 %802
      %804 = vrot.lane.b32.xlu0 %v794, 111
      %v805 = vpop.permute.xlu0 %804
      %806 = vrot.lane.b32.xlu0 %v795, 111
      %v807 = vpop.permute.xlu0 %806
      %v808 = vsel %vm564, %v801, %v803
      %v809 = vsel %vm564, %v805, %v807
      %v816 = vadd.f32 %v778, %v801
      %v817 = vadd.f32 %v779, %v808
      %v818 = vadd.f32 %v780, %v803
      %v819 = vadd.f32 %v781, %v805
      %v820 = vadd.f32 %v782, %v809
      %v821 = vadd.f32 %v783, %v807
      %v822 = vld [vmem:[#allocation2 + $0x8] sm:$0xff]
      %v823 = vld [vmem:[#allocation2 + $0x10] sm:$0xff]
      %v824 = vld [vmem:[#allocation2 + $0x18] sm:$0xff]
      %v825 = vld [vmem:[#allocation2 + $0x28] sm:$0xff]
      %v826 = vld [vmem:[#allocation2 + $0x30] sm:$0xff]
      %v827 = vld [vmem:[#allocation2 + $0x38] sm:$0xff]
      %828 = vrot.lane.b32.xlu0 %v652, 1
      %v829 = vpop.permute.xlu0 %828
      %830 = vrot.lane.b32.xlu0 %v656, 1
      %v831 = vpop.permute.xlu0 %830
      %vm832 = vcmask 7168
      %v833 = vsel %vm832, %v829, %v831
      %v837 = vmul.f32 %v822, %v829
      %v838 = vmul.f32 %v823, %v833
      %v839 = vmul.f32 %v824, %v831
      %v840 = vmul.f32 %v825, %v829
      %v841 = vmul.f32 %v826, %v833
      %v842 = vmul.f32 %v827, %v831
      %843 = vset.pattern.permute.xlu0 5
      %844 = vperm.xlu0 %843, %v542
      %v845 = vpop.permute.xlu0 %844
      %847 = vset.pattern.permute.xlu0 5
      %848 = vperm.xlu0 %847, %v543
      %v849 = vpop.permute.xlu0 %848
      %v851 = vmul.f32 %v837, %v845
      %v852 = vmul.f32 %v838, %v845
      %v853 = vmul.f32 %v839, %v845
      %v854 = vmul.f32 %v840, %v849
      %v855 = vmul.f32 %v841, %v849
      %v856 = vmul.f32 %v842, %v849
      %863 = vrot.lane.b32.xlu0 %v851, 110
      %v864 = vpop.permute.xlu0 %863
      %865 = vrot.lane.b32.xlu0 %v852, 110
      %v866 = vpop.permute.xlu0 %865
      %867 = vrot.lane.b32.xlu0 %v853, 110
      %v868 = vpop.permute.xlu0 %867
      %869 = vrot.lane.b32.xlu0 %v854, 110
      %v870 = vpop.permute.xlu0 %869
      %871 = vrot.lane.b32.xlu0 %v855, 110
      %v872 = vpop.permute.xlu0 %871
      %873 = vrot.lane.b32.xlu0 %v856, 110
      %v874 = vpop.permute.xlu0 %873
      %vm875 = vcmask 900096
      %v876 = vsel %vm875, %v864, %v866
      %v877 = vsel %vm875, %v866, %v868
      %v878 = vsel %vm875, %v870, %v872
      %v879 = vsel %vm875, %v872, %v874
      %v886 = vadd.f32 %v816, %v864
      %v887 = vadd.f32 %v817, %v876
      %v888 = vadd.f32 %v818, %v877
      %v889 = vadd.f32 %v819, %v870
      %v890 = vadd.f32 %v820, %v878
      %v891 = vadd.f32 %v821, %v879
      %892 = vrot.lane.b32.xlu0 %v555, 15
      %v893 = vpop.permute.xlu0 %892
      %894 = vrot.lane.b32.xlu0 %v559, 15
      %v895 = vpop.permute.xlu0 %894
      %vm896 = vcmask 121856
      %v897 = vsel %vm896, %v893, %v895
      %v901 = vmul.f32 %v822, %v893
      %v902 = vmul.f32 %v823, %v897
      %v903 = vmul.f32 %v824, %v895
      %v904 = vmul.f32 %v825, %v893
      %v905 = vmul.f32 %v826, %v897
      %v906 = vmul.f32 %v827, %v895
      %907 = vset.pattern.permute.xlu0 6
      %908 = vperm.xlu0 %907, %v542
      %v909 = vpop.permute.xlu0 %908
      %911 = vset.pattern.permute.xlu0 6
      %912 = vperm.xlu0 %911, %v543
      %v913 = vpop.permute.xlu0 %912
      %v915 = vmul.f32 %v901, %v909
      %v916 = vmul.f32 %v902, %v909
      %v917 = vmul.f32 %v903, %v909
      %v918 = vmul.f32 %v904, %v913
      %v919 = vmul.f32 %v905, %v913
      %v920 = vmul.f32 %v906, %v913
      %927 = vrot.lane.b32.xlu0 %v915, 96
      %v928 = vpop.permute.xlu0 %927
      %929 = vrot.lane.b32.xlu0 %v916, 96
      %v930 = vpop.permute.xlu0 %929
      %931 = vrot.lane.b32.xlu0 %v917, 96
      %v932 = vpop.permute.xlu0 %931
      %933 = vrot.lane.b32.xlu0 %v918, 96
      %v934 = vpop.permute.xlu0 %933
      %935 = vrot.lane.b32.xlu0 %v919, 96
      %v936 = vpop.permute.xlu0 %935
      %937 = vrot.lane.b32.xlu0 %v920, 96
      %v938 = vpop.permute.xlu0 %937
      %vm939 = vcmask 785408
      %v940 = vsel %vm939, %v928, %v930
      %v941 = vsel %vm939, %v930, %v932
      %v942 = vsel %vm939, %v934, %v936
      %v943 = vsel %vm939, %v936, %v938
      %v950 = vadd.f32 %v886, %v928
      %v951 = vadd.f32 %v887, %v940
      %v952 = vadd.f32 %v888, %v941
      %v953 = vadd.f32 %v889, %v934
      %v954 = vadd.f32 %v890, %v942
      %v955 = vadd.f32 %v891, %v943
      %956 = vset.pattern.permute.xlu0 7
      %957 = vperm.xlu0 %956, %v542
      %v958 = vpop.permute.xlu0 %957
      %960 = vset.pattern.permute.xlu0 7
      %961 = vperm.xlu0 %960, %v543
      %v962 = vpop.permute.xlu0 %961
      %v964 = vmul.f32 %v822, %v958
      %v965 = vmul.f32 %v823, %v958
      %v966 = vmul.f32 %v824, %v958
      %v967 = vmul.f32 %v825, %v962
      %v968 = vmul.f32 %v826, %v962
      %v969 = vmul.f32 %v827, %v962
      %976 = vrot.lane.b32.xlu0 %v964, 95
      %v977 = vpop.permute.xlu0 %976
      %978 = vrot.lane.b32.xlu0 %v965, 95
      %v979 = vpop.permute.xlu0 %978
      %980 = vrot.lane.b32.xlu0 %v966, 95
      %v981 = vpop.permute.xlu0 %980
      %982 = vrot.lane.b32.xlu0 %v967, 95
      %v983 = vpop.permute.xlu0 %982
      %984 = vrot.lane.b32.xlu0 %v968, 95
      %v985 = vpop.permute.xlu0 %984
      %986 = vrot.lane.b32.xlu0 %v969, 95
      %v987 = vpop.permute.xlu0 %986
      %vm988 = vcmask 777216
      %v989 = vsel %vm988, %v977, %v979
      %v990 = vsel %vm988, %v979, %v981
      %v991 = vsel %vm988, %v983, %v985
      %v992 = vsel %vm988, %v985, %v987
      %v999 = vadd.f32 %v950, %v977
      %v1000 = vadd.f32 %v951, %v989
      %v1001 = vadd.f32 %v952, %v990
      %v1002 = vadd.f32 %v953, %v983
      %v1003 = vadd.f32 %v954, %v991
      %v1004 = vadd.f32 %v955, %v992
      %1005 = vrot.lane.b32.xlu0 %v652, 17
      %v1006 = vpop.permute.xlu0 %1005
      %1007 = vrot.lane.b32.xlu0 %v656, 17
      %v1008 = vpop.permute.xlu0 %1007
      %vm1009 = vcmask 138240
      %v1010 = vsel %vm1009, %v1006, %v1008
      %v1014 = vmul.f32 %v822, %v1006
      %v1015 = vmul.f32 %v823, %v1010
      %v1016 = vmul.f32 %v824, %v1008
      %v1017 = vmul.f32 %v825, %v1006
      %v1018 = vmul.f32 %v826, %v1010
      %v1019 = vmul.f32 %v827, %v1008
      %1020 = vset.pattern.permute.xlu0 8
      %1021 = vperm.xlu0 %1020, %v542
      %v1022 = vpop.permute.xlu0 %1021
      %1024 = vset.pattern.permute.xlu0 8
      %1025 = vperm.xlu0 %1024, %v543
      %v1026 = vpop.permute.xlu0 %1025
      %v1028 = vmul.f32 %v1014, %v1022
      %v1029 = vmul.f32 %v1015, %v1022
      %v1030 = vmul.f32 %v1016, %v1022
      %v1031 = vmul.f32 %v1017, %v1026
      %v1032 = vmul.f32 %v1018, %v1026
      %v1033 = vmul.f32 %v1019, %v1026
      %1040 = vrot.lane.b32.xlu0 %v1028, 94
      %v1041 = vpop.permute.xlu0 %1040
      %1042 = vrot.lane.b32.xlu0 %v1029, 94
      %v1043 = vpop.permute.xlu0 %1042
      %1044 = vrot.lane.b32.xlu0 %v1030, 94
      %v1045 = vpop.permute.xlu0 %1044
      %1046 = vrot.lane.b32.xlu0 %v1031, 94
      %v1047 = vpop.permute.xlu0 %1046
      %1048 = vrot.lane.b32.xlu0 %v1032, 94
      %v1049 = vpop.permute.xlu0 %1048
      %1050 = vrot.lane.b32.xlu0 %v1033, 94
      %v1051 = vpop.permute.xlu0 %1050
      %vm1052 = vcmask 769024
      %v1053 = vsel %vm1052, %v1041, %v1043
      %v1054 = vsel %vm1052, %v1043, %v1045
      %v1055 = vsel %vm1052, %v1047, %v1049
      %v1056 = vsel %vm1052, %v1049, %v1051
      %v1063 = vadd.f32 %v999, %v1041
      %v1064 = vadd.f32 %v1000, %v1053
      %v1065 = vadd.f32 %v1001, %v1054
      %v1066 = vadd.f32 %v1002, %v1047
      %v1067 = vadd.f32 %v1003, %v1055
      %v1068 = vadd.f32 %v1004, %v1056
      %v1069 = vld [vmem:[%s4] sm:$0xff]
      %v1070 = vld [vmem:[%s4 + $0x8] sm:$0xff]
      %1072 = vset.pattern.permute.xlu0 0
      %1073 = vperm.xlu0 %1072, %v1069
      %v1074 = vpop.permute.xlu0 %1073
      %1077 = vset.pattern.permute.xlu0 0
      %1078 = vperm.xlu0 %1077, %v1070
      %v1079 = vpop.permute.xlu0 %1078
      %v1081 = vadd.f32 %v1063, %v1074
      %v1082 = vadd.f32 %v1064, %v1074
      %v1083 = vadd.f32 %v1065, %v1074
      %v1084 = vadd.f32 %v1066, %v1079
      %v1085 = vadd.f32 %v1067, %v1079
      %v1086 = vadd.f32 %v1068, %v1079
      %v1087 = vadd.f32 %v1081, 3.0
      %v1088 = vadd.f32 %v1082, 3.0
      %v1089 = vadd.f32 %v1083, 3.0
      %v1090 = vadd.f32 %v1084, 3.0
      %v1091 = vadd.f32 %v1085, 3.0
      %v1092 = vadd.f32 %v1086, 3.0
      %v1093 = vmax.f32 %v1087, 0.0
      %v1094 = vmax.f32 %v1088, 0.0
      %v1095 = vmax.f32 %v1089, 0.0
      %v1096 = vmax.f32 %v1090, 0.0
      %v1097 = vmax.f32 %v1091, 0.0
      %v1098 = vmax.f32 %v1092, 0.0
      %v1099 = vmin.f32 %v1093, 6.0
      %v1100 = vmin.f32 %v1094, 6.0
      %v1101 = vmin.f32 %v1095, 6.0
      %v1102 = vmin.f32 %v1096, 6.0
      %v1103 = vmin.f32 %v1097, 6.0
      %v1104 = vmin.f32 %v1098, 6.0
      %v1105 = vmul.f32 %v1081, %v1099
      %v1106 = vmul.f32 %v1082, %v1100
      %v1107 = vmul.f32 %v1083, %v1101
      %v1108 = vmul.f32 %v1084, %v1102
      %v1109 = vmul.f32 %v1085, %v1103
      %v1110 = vmul.f32 %v1086, %v1104
      %v1111 = vmul.f32 %v1105, 0.16666667
      %v1112 = vmul.f32 %v1106, 0.16666667
      %v1113 = vmul.f32 %v1107, 0.16666667
      %v1114 = vmul.f32 %v1108, 0.16666667
      %v1115 = vmul.f32 %v1109, 0.16666667
      %v1116 = vmul.f32 %v1110, 0.16666667
      %1123 = vrot.lane.b32.xlu0 %v1111, 17
      %v1124 = vpop.permute.xlu0 %1123
      %1125 = vrot.lane.b32.xlu0 %v1112, 17
      %v1126 = vpop.permute.xlu0 %1125
      %1127 = vrot.lane.b32.xlu0 %v1113, 17
      %v1128 = vpop.permute.xlu0 %1127
      %1129 = vrot.lane.b32.xlu0 %v1114, 17
      %v1130 = vpop.permute.xlu0 %1129
      %1131 = vrot.lane.b32.xlu0 %v1115, 17
      %v1132 = vpop.permute.xlu0 %1131
      %1133 = vrot.lane.b32.xlu0 %v1116, 17
      %v1134 = vpop.permute.xlu0 %1133
      %v1135 = vsel %vm1009, %v1124, %v1126
      %v1136 = vsel %vm1009, %v1126, %v1128
      %v1137 = vsel %vm1009, %v1130, %v1132
      %v1138 = vsel %vm1009, %v1132, %v1134
      %v1143 = vadd.f32 %v1135, %v1136
      %1144 = vadd.xlane.f32.xlu0 %v1143
      %v1145 = vpop.xlane.xlu0 %1144
      %v1146 = vadd.f32 %v1137, %v1138
      %1147 = vadd.xlane.f32.xlu0 %v1146
      %v1148 = vpop.xlane.xlu0 %1147
      %v1149 = vrcp.pop 256.0
      %v1150 = vmul.f32 %v1145, %v1149
      %v1151 = vmul.f32 %v1148, %v1149
      %v1152 = vld [vmem:[%s6] sm:$0xff]
      %v1153 = vld [vmem:[%s6 + $0x8] sm:$0xff]
      %v1154 = vmul.f32 %v1152, %v1150
      %v1155 = vmul.f32 %v1153, %v1151
      %v1156 = vsel %vm430, %v1154, 0.0
      %v1157 = vsel %vm430, %v1155, 0.0
      %v1158 = vadd.f32 %v1156, %v1157
      %v1159 = vrot.slane %v1158, 4
      %v1160 = vadd.f32 %v1158, %v1159
      %v1161 = vrot.slane %v1160, 2
      %v1162 = vadd.f32 %v1160, %v1161
      %v1163 = vrot.slane %v1162, 1
      %v1164 = vadd.f32 %v1162, %v1163
      %v1165 = vld [vmem:[%s7] sm:$0x1]
      %v1166 = vadd.f32 %v1164, %v1165
      %v1167 = vmax.f32 %v1166, 0.0
      %v1168 = vld [vmem:[%s8] sm:$0xff]
      %v1169 = vld [vmem:[%s8 + $0x8] sm:$0xff]
      %v1170 = vlaneseq
      %v1171 = vshrl.u32 %v1170, 7
      %v1172 = vsub.s32 0, %v1171
      %v1173 = vrot.slane %v1167, %v1172
      %v1174 = vmul.f32 %v1168, %v1173
      %v1175 = vmul.f32 %v1169, %v1173
      %v1176 = vsel %vm430, %v1174, 0.0
      %1177 = vadd.xlane.f32.xlu0 %v1176
      %v1178 = vpop.xlane.xlu0 %1177
      %v1179 = vsel %vm430, %v1175, 0.0
      %1180 = vadd.xlane.f32.xlu0 %v1179
      %v1181 = vpop.xlane.xlu0 %1180
      %v1182 = vld [vmem:[%s9] sm:$0xff]
      %v1183 = vld [vmem:[%s9 + $0x8] sm:$0xff]
      %v1184 = vadd.f32 %v1178, %v1182
      %v1185 = vadd.f32 %v1181, %v1183
      %v1186 = vadd.f32 %v1184, 3.0
      %v1187 = vadd.f32 %v1185, 3.0
      %v1188 = vmax.f32 %v1186, 0.0
      %v1189 = vmax.f32 %v1187, 0.0
      %v1190 = vmin.f32 %v1188, 6.0
      %v1191 = vmin.f32 %v1189, 6.0
      %v1192 = vmul.f32 %v1190, 0.16666667
      %v1193 = vmul.f32 %v1191, 0.16666667
      %1195 = vset.pattern.permute.xlu0 0
      %1196 = vperm.xlu0 %1195, %v1192
      %v1197 = vpop.permute.xlu0 %1196
      %1200 = vset.pattern.permute.xlu0 0
      %1201 = vperm.xlu0 %1200, %v1193
      %v1202 = vpop.permute.xlu0 %1201
      %v1204 = vmul.f32 %v1111, %v1197
      %v1205 = vmul.f32 %v1112, %v1197
      %v1206 = vmul.f32 %v1113, %v1197
      %v1207 = vmul.f32 %v1114, %v1202
      %v1208 = vmul.f32 %v1115, %v1202
      %v1209 = vmul.f32 %v1116, %v1202
      %v1210 = vld [vmem:[%s10] sm:$0xff]
      %v1211 = vld [vmem:[%s11] sm:$0xff]
      %1213 = vset.pattern.permute.xlu0 0
      %1214 = vperm.xlu0 %1213, %v1211
      %v1215 = vpop.permute.xlu0 %1214
      %1223 = vrot.lane.b32.xlu0 %v1204, 17
      %v1224 = vpop.permute.xlu0 %1223
      %1225 = vrot.lane.b32.xlu0 %v1205, 17
      %v1226 = vpop.permute.xlu0 %1225
      %1227 = vrot.lane.b32.xlu0 %v1206, 17
      %v1228 = vpop.permute.xlu0 %1227
      %1229 = vrot.lane.b32.xlu0 %v1207, 17
      %v1230 = vpop.permute.xlu0 %1229
      %1231 = vrot.lane.b32.xlu0 %v1208, 17
      %v1232 = vpop.permute.xlu0 %1231
      %1233 = vrot.lane.b32.xlu0 %v1209, 17
      %v1234 = vpop.permute.xlu0 %1233
      %v1235 = vsel %vm1009, %v1224, %v1226
      %v1236 = vsel %vm1009, %v1226, %v1228
      %v1237 = vsel %vm1009, %v1230, %v1232
      %v1238 = vsel %vm1009, %v1232, %v1234
      %vm1243 = vcmask 130048
      %v1245 = vsel %vm1243, %v1210, 0
      %1247 = vmatprep.subr.mxu0 %v1236
      %1248 = vmatpush1.msra.mxu0 %v1235
      %1249 = vmatprep.subr.mxu0 %v1238
      %1250 = vmatpush1.msra.mxu0 %v1237
      %1251 = vmatprep.subr.mxu0 0.0
      %1252 = vmatpush1.msra.mxu0 0.0
      %1253 = vmatprep.subr.mxu0 0.0
      %1254 = vmatpush1.msra.mxu0 0.0
      %1255 = vmatprep.subr.mxu0 0.0
      %1256 = vmatpush1.msra.mxu0 0.0
      %1257 = vmatprep.subr.mxu0 0.0
      %1258 = vmatpush1.msra.mxu0 0.0
      %1259 = vmatprep.subr.mxu0 0.0
      %1260 = vmatpush1.msra.mxu0 0.0
      %1261 = vmatprep.subr.mxu0 0.0
      %1262 = vmatpush1.msra.mxu0 0.0
      %1263 = vmatprep.subr.mxu0 0.0
      %1264 = vmatpush1.msra.mxu0 0.0
      %1265 = vmatprep.subr.mxu0 0.0
      %1266 = vmatpush1.msra.mxu0 0.0
      %1267 = vmatprep.subr.mxu0 0.0
      %1268 = vmatpush1.msra.mxu0 0.0
      %1269 = vmatprep.subr.mxu0 0.0
      %1270 = vmatpush1.msra.mxu0 0.0
      %1271 = vmatprep.subr.mxu0 0.0
      %1272 = vmatpush1.msra.mxu0 0.0
      %1273 = vmatprep.subr.mxu0 0.0
      %1274 = vmatpush1.msra.mxu0 0.0
      %1275 = vmatprep.subr.mxu0 0.0
      %1276 = vmatpush1.msra.mxu0 0.0
      %1277 = vmatprep.subr.mxu0 0.0
      %1278 = vmatpush1.msra.mxu0 0.0
      %1279 = vmatprep.subr.mxu0 0.0
      %1280 = vmatpush1.msra.mxu0 0.0
      %1281 = vmatprep.subr.mxu0 0.0
      %1282 = vmatpush1.msra.mxu0 0.0
      %1283 = vmatprep.subr.mxu0 0.0
      %1284 = vmatpush1.msra.mxu0 0.0
      %1285 = vmatprep.subr.mxu0 0.0
      %1286 = vmatpush1.msra.mxu0 0.0
      %1287 = vmatprep.subr.mxu0 0.0
      %1288 = vmatpush1.msra.mxu0 0.0
      %1289 = vmatprep.subr.mxu0 0.0
      %1290 = vmatpush1.msra.mxu0 0.0
      %1291 = vmatprep.subr.mxu0 0.0
      %1292 = vmatpush1.msra.mxu0 0.0
      %1293 = vmatprep.subr.mxu0 0.0
      %1294 = vmatpush1.msra.mxu0 0.0
      %1295 = vmatprep.subr.mxu0 0.0
      %1296 = vmatpush1.msra.mxu0 0.0
      %1297 = vmatprep.subr.mxu0 0.0
      %1298 = vmatpush1.msra.mxu0 0.0
      %1299 = vmatprep.subr.mxu0 0.0
      %1300 = vmatpush1.msra.mxu0 0.0
      %1301 = vmatprep.subr.mxu0 0.0
      %1302 = vmatpush1.msra.mxu0 0.0
      %1303 = vmatprep.subr.mxu0 0.0
      %1304 = vmatpush1.msra.mxu0 0.0
      %1305 = vmatprep.subr.mxu0 0.0
      %1306 = vmatpush1.msra.mxu0 0.0
      %1307 = vmatprep.subr.mxu0 0.0
      %1308 = vmatpush1.msra.mxu0 0.0
      %1309 = vmatprep.subr.mxu0 0.0
      %1310 = vmatpush1.msra.mxu0 0.0
      %1311 = vmatprep.mubr.f32.mxu0 0.0
      %1312 = vmatmul.mubr.f32.gmra.mrb[0].mxu0 %v1245
      %v1313 = vpop.f32.mrb[0].mxu0
      %v1314 = vadd.f32 %v1215, %v1313
      %v1315 = vpop.f32.mrb[0].mxu0
      %v1316 = vadd.f32 %v1215, %v1315
      %1317 = vdwg.mxu0
      %v1318 = vadd.f32 %v1314, %v414
      %v1319 = vadd.f32 %v1316, %v415
      %1320 = vst [vmem:[%s413] sm:$0xff] %v1318
      %1321 = vst [vmem:[%s413 + $0x8] sm:$0xff] %v1319
      %p1322 = scmp.lt.s32.totalorder %s23, 1
      %s1323 = scalar_select %p1322, %s23, 1
      %s1324 = smul.addr %s1323, 2
      %s1325 = smul.addr %s1324, 8
      %s1326 = scalar_lea.vmem %s12, %s1325
      // Predicated region
      $region69: #{inverted_residual_forward.1} parent=67 // pred_check
        %p1327 = pneg %p298
      $region70: #{inverted_residual_forward.1} parent=67 // pred_check_branch
        %1329 = sbr.rel (%p1327) target = $region72
      $region71: #{inverted_residual_forward.1} parent=67 // pred_region
        _
      $region72: #{inverted_residual_forward.1} parent=67 // pred_fallthru
        _
    $region68: #{inverted_residual_forward.1} parent=5 // pred_fallthru
      _
    %p1330 = scmp.le.s32.totalorder 2, %s18
    // Predicated region
    $region73: #{inverted_residual_forward.1} parent=5 // pred_check
      %p1331 = pneg %p1330
    $region74: #{inverted_residual_forward.1} parent=5 // pred_check_branch
      %1333 = sbr.rel (%p1331) target = $region76
    $region75: #{inverted_residual_forward.1} parent=5 // pred_region
      %s1334 = ssub.s32 %s18, 2
      // Predicated region
      $region77: #{inverted_residual_forward.1} parent=75 // pred_check
        %p1335 = pneg %p304
      $region78: #{inverted_residual_forward.1} parent=75 // pred_check_branch
        %1337 = sbr.rel (%p1335) target = $region80
      $region79: #{inverted_residual_forward.1} parent=75 // pred_region
        %p1338 = scmp.lt.s32.totalorder %s24, 1
        %s1339 = scalar_select %p1338, %s24, 1
        %s1340 = smul.addr %s1339, 2
        %s1341 = smul.addr %s1340, 8
        %s1342 = scalar_lea.vmem %s12, %s1341
      $region80: #{inverted_residual_forward.1} parent=75 // pred_fallthru
        _
    $region76: #{inverted_residual_forward.1} parent=5 // pred_fallthru
      _
  $region6: #{inverted_residual_forward.1} parent=0 // loop_footer
    %s22 = sadd.s32 1, %s18
  $region7: #{inverted_residual_forward.1} parent=0 // loop_footer_branch
    %17 = sbr.rel target = $region3
  $region8: #{inverted_residual_forward.1} parent=0 // loop_exit
    _

</llo_original>
